<compile_context>
chip_gen: v7x
topology: tpu7x:2x2x1
jax: 0.10.0
libtpu: 0.0.40
codegen_flags: <defaults>
</compile_context>

<pallas_src>
import functools

import jax
import jax.numpy as jnp
import numpy as np
from jax.experimental import pallas as pl
from jax.experimental.pallas import tpu as pltpu

EPS = 1e-5          # nn.InstanceNorm3d default eps (affine=False, no running stats)
MAX_P_TILE = 2048   # lane-dim tile; already at the ~85% HBM-roofline plateau


def _round_up(x, m):
    return ((x + m - 1) // m) * m


def _pick_p_tile(kc_pad, cout, p, *, vmem_budget=24 << 20, max_tile=MAX_P_TILE):
    """Pick a P tile (multiple of 128) that keeps double-buffered blocks under budget."""
    per_col = 2 * (kc_pad * 2 + cout * 4)          # 2 bufs * (bf16 patches + f32 out)
    fit = max(128, (vmem_budget // per_col) // 128 * 128)
    tile = min(max_tile, fit)
    tile = min(tile, max(128, _round_up(p, 128)))  # no need to exceed problem size
    return tile


def _conv_act_stats_kernel(patches_ref, w_ref, b_ref, alpha_ref,
                           y_ref, mean_ref, rstd_ref,
                           sum_sc, ssq_sc, *, p_valid, p_tile):
    # patches_ref: (1, Kc_pad, Pt)  VMEM bf16
    # w_ref:       (Cout, Kc_pad)   VMEM bf16
    # b_ref:       (Cout, 1)        VMEM f32
    # alpha_ref:   (1,)             SMEM f32 (PReLU slope)
    # y_ref:       (1, Cout, Pt)    VMEM f32  (pre-norm activations, lane-dense)
    # mean_ref/rstd_ref: (1, Cout, 1) VMEM f32 (written on the last P tile)
    # sum_sc/ssq_sc: (Cout, 1) f32 scratch, live across the P-tile ('arbitrary') axis
    t = pl.program_id(1)
    num_t = pl.num_programs(1)

    @pl.when(t == 0)
    def _():
        sum_sc[...] = jnp.zeros_like(sum_sc)
        ssq_sc[...] = jnp.zeros_like(ssq_sc)

    # Conv as matmul on the MXU: bf16 inputs, f32 accumulation. Result is (Cout, Pt),
    # i.e. lane-dense along the spatial axis.
    y = jnp.dot(w_ref[...], patches_ref[0], preferred_element_type=jnp.float32)
    y = y + b_ref[...]                                  # bias broadcast over lanes
    a = alpha_ref[0]
    y = jnp.where(y > 0, y, a * y)                      # PReLU
    # Dropout3d(p=0.0) is the identity.

    y_ref[0] = y                                        # store pre-norm activations

    # Single-pass InstanceNorm statistics (sum & sum-of-squares), masking any padded
    # spatial columns so they do not contribute to mean/var.
    if p_valid % p_tile != 0:
        col = t * p_tile + jax.lax.broadcasted_iota(jnp.int32, y.shape, 1)
        y_stats = jnp.where(col < p_valid, y, 0.0)
    else:
        y_stats = y
    sum_sc[...] += jnp.sum(y_stats, axis=1, keepdims=True)
    ssq_sc[...] += jnp.sum(y_stats * y_stats, axis=1, keepdims=True)

    @pl.when(t == num_t - 1)
    def _():
        inv_p = jnp.float32(1.0 / p_valid)
        mu = sum_sc[...] * inv_p
        var = ssq_sc[...] * inv_p - mu * mu
        mean_ref[0] = mu
        rstd_ref[0] = jax.lax.rsqrt(jnp.maximum(var, 0.0) + EPS)


def _instance_norm_kernel(y_ref, mean_ref, rstd_ref, o_ref):
    # y_ref/o_ref: (1, Cout, Pt) f32; mean_ref/rstd_ref: (1, Cout, 1) f32
    o_ref[0] = (y_ref[0] - mean_ref[0]) * rstd_ref[0]


@functools.partial(jax.jit, static_argnames=("stride", "padding"))
def conv3d_adn_forward(x_ncdhw, weight, bias, alpha, stride=1, padding=1):
    """x_ncdhw: (N, Cin, D, H, W); weight: (Cout, Cin, K, K, K); bias: (Cout,)."""
    N, Cin, D, H, W = x_ncdhw.shape
    Cout, _, K, _, _ = weight.shape

    Do = (D + 2 * padding - K) // stride + 1
    Ho = (H + 2 * padding - K) // stride + 1
    Wo = (W + 2 * padding - K) // stride + 1
    P = Do * Ho * Wo
    Kc = K * K * K * Cin
    Kc_pad = _round_up(Kc, 16)              # bf16 sublane multiple (Kc is NOT a lane dim)

    P_TILE = _pick_p_tile(Kc_pad, Cout, P)
    P_pad = _round_up(P, P_TILE)
    num_pt = P_pad // P_TILE

    # ---- glue: NCDHW -> NDHWC (bf16), pad, im2col in (Kc, P) layout ----
    x = jnp.transpose(x_ncdhw, (0, 2, 3, 4, 1)).astype(jnp.bfloat16)
    xp = jnp.pad(x, ((0, 0), (padding,) * 2, (padding,) * 2, (padding,) * 2, (0, 0)))
    cols = []
    for kd in range(K):
        for kh in range(K):
            for kw in range(K):
                cols.append(xp[:, kd:kd + stride * Do:stride,
                               kh:kh + stride * Ho:stride,
                               kw:kw + stride * Wo:stride, :])
    patches = jnp.stack(cols, axis=1)                   # (N, K^3, Do, Ho, Wo, Cin)
    patches = jnp.moveaxis(patches, -1, 2)              # (N, K^3, Cin, Do, Ho, Wo)
    patches = patches.reshape(N, Kc, P)                 # (N, Kc, P) -- P is the lane dim
    # single combined pad (Kc -> Kc_pad sublane alignment, P -> P_pad tile alignment)
    patches = jnp.pad(patches, ((0, 0), (0, Kc_pad - Kc), (0, P_pad - P)))

    # weight (Cout, Cin, kd, kh, kw) -> (Cout, kd, kh, kw, Cin) -> (Cout, Kc) bf16
    w2d = jnp.transpose(weight, (0, 2, 3, 4, 1)).reshape(Cout, Kc).astype(jnp.bfloat16)
    w2d = jnp.pad(w2d, ((0, 0), (0, Kc_pad - Kc)))
    b2d = bias.reshape(Cout, 1).astype(jnp.float32)
    alpha_arr = jnp.reshape(jnp.asarray(alpha, jnp.float32), (1,))

    kernel1 = functools.partial(_conv_act_stats_kernel, p_valid=P, p_tile=P_TILE)

    # Pass 1: conv + bias + PReLU, lane-dense output, streamed InstanceNorm stats.
    # Grid (N, P-tiles): N is 'parallel' (shards across v7x's 2 TCs), P is 'arbitrary'
    # (stats accumulate across it in scratch).
    y_act, mean, rstd = pl.pallas_call(
        kernel1,
        out_shape=(jax.ShapeDtypeStruct((N, Cout, P_pad), jnp.float32),
                   jax.ShapeDtypeStruct((N, Cout, 1), jnp.float32),
                   jax.ShapeDtypeStruct((N, Cout, 1), jnp.float32)),
        grid=(N, num_pt),
        in_specs=[
            pl.BlockSpec((1, Kc_pad, P_TILE), lambda n, t: (n, 0, t)),
            pl.BlockSpec((Cout, Kc_pad), lambda n, t: (0, 0)),
            pl.BlockSpec((Cout, 1), lambda n, t: (0, 0)),
            pl.BlockSpec(memory_space=pltpu.MemorySpace.SMEM),
        ],
        out_specs=(
            pl.BlockSpec((1, Cout, P_TILE), lambda n, t: (n, 0, t)),
            pl.BlockSpec((1, Cout, 1), lambda n, t: (n, 0, 0)),
            pl.BlockSpec((1, Cout, 1), lambda n, t: (n, 0, 0)),
        ),
        scratch_shapes=[pltpu.VMEM((Cout, 1), jnp.float32),
                        pltpu.VMEM((Cout, 1), jnp.float32)],
        compiler_params=pltpu.CompilerParams(
            dimension_semantics=("parallel", "arbitrary"),
            vmem_limit_bytes=32 * 1024 * 1024),
    )(patches, w2d, b2d, alpha_arr)

    # Pass 2: normalize with the per-sample/per-channel stats (in-place over y_act).
    out = pl.pallas_call(
        _instance_norm_kernel,
        out_shape=jax.ShapeDtypeStruct((N, Cout, P_pad), jnp.float32),
        grid=(N, num_pt),
        in_specs=[
            pl.BlockSpec((1, Cout, P_TILE), lambda n, t: (n, 0, t)),
            pl.BlockSpec((1, Cout, 1), lambda n, t: (n, 0, 0)),
            pl.BlockSpec((1, Cout, 1), lambda n, t: (n, 0, 0)),
        ],
        out_specs=pl.BlockSpec((1, Cout, P_TILE), lambda n, t: (n, 0, t)),
        input_output_aliases={0: 0},
        compiler_params=pltpu.CompilerParams(
            dimension_semantics=("parallel", "parallel"),
            vmem_limit_bytes=32 * 1024 * 1024),
    )(y_act, mean, rstd)

    # (N, Cout, P) reshapes directly into NCDHW -- no output transpose needed.
    return out[:, :, :P].reshape(N, Cout, Do, Ho, Wo)


def reference(x, weight, bias, alpha, stride=1, padding=1):
    y = jax.lax.conv_general_dilated(
        x, weight, window_strides=(stride,) * 3,
        padding=[(padding, padding)] * 3,
        dimension_numbers=("NCDHW", "OIDHW", "NCDHW"),
        precision=jax.lax.Precision.HIGHEST)
    y = y + bias.reshape(1, -1, 1, 1, 1)
    y = jnp.where(y > 0, y, alpha * y)
    mean = jnp.mean(y, axis=(2, 3, 4), keepdims=True)
    var = jnp.mean((y - mean) ** 2, axis=(2, 3, 4), keepdims=True)
    return (y - mean) * jax.lax.rsqrt(var + EPS)


if __name__ == "__main__":
    key = jax.random.PRNGKey(0)
    kx, kw = jax.random.split(key)

    # Module config (small synthetic shapes). D=12, H=W=16 -> P=3072, which exercises
    # multiple P tiles (P_TILE=2048) plus the masked partial tail tile.
    N, Cin, Cout, D, H, W, K = 2, 4, 8, 12, 16, 16, 3
    stride, padding = 1, 1

    x = jax.random.normal(kx, (N, Cin, D, H, W), dtype=jnp.float32)

    # Deterministic parameter init mirroring the module's init_weights():
    #   kaiming_normal_ (fan_in mode, std = sqrt(2/fan_in)), bias = 0,
    #   PReLU default single slope = 0.25.
    fan_in = Cin * K * K * K
    weight = jax.random.normal(kw, (Cout, Cin, K, K, K),
                               dtype=jnp.float32) * np.sqrt(2.0 / fan_in)
    bias = jnp.zeros((Cout,), dtype=jnp.float32)
    alpha = 0.25

    out = conv3d_adn_forward(x, weight, bias, alpha, stride=stride, padding=padding)
    out = jax.block_until_ready(out)
    assert out.shape == (N, Cout, D, H, W)

    ref = reference(x, weight, bias, alpha, stride, padding)
    # Tolerance covers bf16 quantization of the matmul inputs (accumulation is f32);
    # observed max |err| is ~7e-3 vs the full-f32 reference.
    np.testing.assert_allclose(np.asarray(out), np.asarray(ref),
                               atol=2e-2, rtol=2e-2)
    print("KERNEL_OK")
</pallas_src>

<mosaic_0001>
module attributes {stable_mosaic.version = 11 : i64} {
  func.func @_conv_act_stats_kernel(%arg0: i32, %arg1: i32, %arg2: memref<1x112x2048xbf16, #tpu.memory_space<vmem>>, %arg3: memref<8x112xbf16, #tpu.memory_space<vmem>>, %arg4: memref<8x1xf32, #tpu.memory_space<vmem>>, %arg5: memref<1xf32, #tpu.memory_space<smem>>, %arg6: memref<1x8x2048xf32, #tpu.memory_space<vmem>>, %arg7: memref<1x8x1xf32, #tpu.memory_space<vmem>>, %arg8: memref<1x8x1xf32, #tpu.memory_space<vmem>>, %arg9: memref<8x1xf32, #tpu.memory_space<vmem>>, %arg10: memref<8x1xf32, #tpu.memory_space<vmem>>) attributes {dimension_semantics = [#tpu.dimension_semantics<parallel>, #tpu.dimension_semantics<arbitrary>], iteration_bounds = array<i64: 2, 2>, scalar_prefetch = 0 : i64, scratch_operands = 2 : i64, tpu.core_type = #tpu.core_type<tc>, window_params = [{transform_indices = @transform_0, window_bounds = array<i64: 1, 112, 2048>}, {pipeline_mode = #tpu.pipeline_mode<synchronous>, transform_indices = @transform_1, window_bounds = array<i64: 8, 112>}, {pipeline_mode = #tpu.pipeline_mode<synchronous>, transform_indices = @transform_2, window_bounds = array<i64: 8, 1>}, {transform_indices = @transform_3, window_bounds = array<i64: 1>}, {transform_indices = @transform_4, window_bounds = array<i64: 1, 8, 2048>}, {transform_indices = @transform_5, window_bounds = array<i64: 1, 8, 1>}, {transform_indices = @transform_6, window_bounds = array<i64: 1, 8, 1>}]} {
    %c0_i32 = arith.constant 0 : i32
    %0 = arith.cmpi eq, %arg1, %c0_i32 : i32
    %1 = arith.extui %0 : i1 to i32
    %c0_i32_0 = arith.constant 0 : i32
    %2 = arith.cmpi ne, %1, %c0_i32_0 : i32
    scf.if %2 {
      %cst_24 = arith.constant 0.000000e+00 : f32
      %41 = vector.broadcast %cst_24 : f32 to vector<8x1xf32>
      %c0_25 = arith.constant 0 : index
      %c0_26 = arith.constant 0 : index
      %42 = vector.load %arg9[%c0_25, %c0_26] : memref<8x1xf32, #tpu.memory_space<vmem>>, vector<8x1xf32>
      tpu.vector_store %arg9[%c0_25, %c0_26], %41 {strides = array<i32>} : memref<8x1xf32, #tpu.memory_space<vmem>>, vector<8x1xf32>,
      %cst_27 = arith.constant 0.000000e+00 : f32
      %43 = vector.broadcast %cst_27 : f32 to vector<8x1xf32>
      %c0_28 = arith.constant 0 : index
      %c0_29 = arith.constant 0 : index
      %44 = vector.load %arg10[%c0_28, %c0_29] : memref<8x1xf32, #tpu.memory_space<vmem>>, vector<8x1xf32>
      tpu.vector_store %arg10[%c0_28, %c0_29], %43 {strides = array<i32>} : memref<8x1xf32, #tpu.memory_space<vmem>>, vector<8x1xf32>,
    } else {
    }
    %c0 = arith.constant 0 : index
    %c0_1 = arith.constant 0 : index
    %3 = vector.load %arg3[%c0, %c0_1] : memref<8x112xbf16, #tpu.memory_space<vmem>>, vector<8x112xbf16>
    %c0_2 = arith.constant 0 : index
    %c0_3 = arith.constant 0 : index
    %c0_4 = arith.constant 0 : index
    %4 = vector.load %arg2[%c0_2, %c0_3, %c0_4] : memref<1x112x2048xbf16, #tpu.memory_space<vmem>>, vector<1x112x2048xbf16>
    %5 = vector.shape_cast %4 : vector<1x112x2048xbf16> to vector<112x2048xbf16>
    %cst = arith.constant dense<0.000000e+00> : vector<8x2048xf32>
    %6 = tpu.matmul %3, %5, %cst {dimension_numbers = #tpu.dot_dimension_numbers<[1], [0], [0], [1], [0, 0, 1, 1], [], []>} : vector<8x112xbf16>, vector<112x2048xbf16>, vector<8x2048xf32> -> vector<8x2048xf32>
    %c0_5 = arith.constant 0 : index
    %c0_6 = arith.constant 0 : index
    %7 = vector.load %arg4[%c0_5, %c0_6] : memref<8x1xf32, #tpu.memory_space<vmem>>, vector<8x1xf32>
    %8 = vector.broadcast %7 : vector<8x1xf32> to vector<8x2048xf32>
    %9 = arith.addf %6, %8 : vector<8x2048xf32>
    %c0_7 = arith.constant 0 : index
    %10 = memref.load %arg5[%c0_7] : memref<1xf32, #tpu.memory_space<smem>>
    %cst_8 = arith.constant 0.000000e+00 : f32
    %11 = vector.broadcast %cst_8 : f32 to vector<8x2048xf32>
    %12 = arith.cmpf ogt, %9, %11 : vector<8x2048xf32>
    %13 = vector.broadcast %10 : f32 to vector<8x2048xf32>
    %14 = arith.mulf %13, %9 : vector<8x2048xf32>
    %15 = arith.select %12, %9, %14 : vector<8x2048xi1>, vector<8x2048xf32>
    %c0_9 = arith.constant 0 : index
    %c0_10 = arith.constant 0 : index
    %c0_11 = arith.constant 0 : index
    %16 = vector.load %arg6[%c0_9, %c0_10, %c0_11] : memref<1x8x2048xf32, #tpu.memory_space<vmem>>, vector<1x8x2048xf32>
    %17 = vector.shape_cast %16 : vector<1x8x2048xf32> to vector<8x2048xf32>
    %18 = vector.shape_cast %15 : vector<8x2048xf32> to vector<1x8x2048xf32>
    tpu.vector_store %arg6[%c0_9, %c0_10, %c0_11], %18 {strides = array<i32>} : memref<1x8x2048xf32, #tpu.memory_space<vmem>>, vector<1x8x2048xf32>,
    %c2048_i32 = arith.constant 2048 : i32
    %19 = arith.muli %arg1, %c2048_i32 : i32
    %20 = tpu.iota {dimensions = array<i32: 1>} : vector<8x2048xi32>
    %21 = vector.broadcast %19 : i32 to vector<8x2048xi32>
    %22 = arith.addi %21, %20 : vector<8x2048xi32>
    %c3072_i32 = arith.constant 3072 : i32
    %23 = vector.broadcast %c3072_i32 : i32 to vector<8x2048xi32>
    %24 = arith.cmpi slt, %22, %23 : vector<8x2048xi32>
    %cst_12 = arith.constant 0.000000e+00 : f32
    %25 = vector.broadcast %cst_12 : f32 to vector<8x2048xf32>
    %26 = arith.select %24, %15, %25 : vector<8x2048xi1>, vector<8x2048xf32>
    %c0_13 = arith.constant 0 : index
    %c0_14 = arith.constant 0 : index
    %27 = vector.load %arg9[%c0_13, %c0_14] : memref<8x1xf32, #tpu.memory_space<vmem>>, vector<8x1xf32>
    %cst_15 = arith.constant dense<0.000000e+00> : vector<8xf32>
    %28 = vector.multi_reduction <add>, %26, %cst_15 [1] : vector<8x2048xf32> to vector<8xf32>
    %29 = vector.shape_cast %28 : vector<8xf32> to vector<8x1xf32>
    %30 = arith.addf %27, %29 : vector<8x1xf32>
    %c0_16 = arith.constant 0 : index
    %c0_17 = arith.constant 0 : index
    %31 = vector.load %arg9[%c0_16, %c0_17] : memref<8x1xf32, #tpu.memory_space<vmem>>, vector<8x1xf32>
    tpu.vector_store %arg9[%c0_16, %c0_17], %30 {strides = array<i32>} : memref<8x1xf32, #tpu.memory_space<vmem>>, vector<8x1xf32>,
    %c0_18 = arith.constant 0 : index
    %c0_19 = arith.constant 0 : index
    %32 = vector.load %arg10[%c0_18, %c0_19] : memref<8x1xf32, #tpu.memory_space<vmem>>, vector<8x1xf32>
    %33 = arith.mulf %26, %26 : vector<8x2048xf32>
    %cst_20 = arith.constant dense<0.000000e+00> : vector<8xf32>
    %34 = vector.multi_reduction <add>, %33, %cst_20 [1] : vector<8x2048xf32> to vector<8xf32>
    %35 = vector.shape_cast %34 : vector<8xf32> to vector<8x1xf32>
    %36 = arith.addf %32, %35 : vector<8x1xf32>
    %c0_21 = arith.constant 0 : index
    %c0_22 = arith.constant 0 : index
    %37 = vector.load %arg10[%c0_21, %c0_22] : memref<8x1xf32, #tpu.memory_space<vmem>>, vector<8x1xf32>
    tpu.vector_store %arg10[%c0_21, %c0_22], %36 {strides = array<i32>} : memref<8x1xf32, #tpu.memory_space<vmem>>, vector<8x1xf32>,
    %c1_i32 = arith.constant 1 : i32
    %38 = arith.cmpi eq, %arg1, %c1_i32 : i32
    %39 = arith.extui %38 : i1 to i32
    %c0_i32_23 = arith.constant 0 : i32
    %40 = arith.cmpi ne, %39, %c0_i32_23 : i32
    scf.if %40 {
      %c0_24 = arith.constant 0 : index
      %c0_25 = arith.constant 0 : index
      %41 = vector.load %arg9[%c0_24, %c0_25] : memref<8x1xf32, #tpu.memory_space<vmem>>, vector<8x1xf32>
      %cst_26 = arith.constant 3.25520843E-4 : f32
      %42 = vector.broadcast %cst_26 : f32 to vector<8x1xf32>
      %43 = arith.mulf %41, %42 : vector<8x1xf32>
      %c0_27 = arith.constant 0 : index
      %c0_28 = arith.constant 0 : index
      %44 = vector.load %arg10[%c0_27, %c0_28] : memref<8x1xf32, #tpu.memory_space<vmem>>, vector<8x1xf32>
      %cst_29 = arith.constant 3.25520843E-4 : f32
      %45 = vector.broadcast %cst_29 : f32 to vector<8x1xf32>
      %46 = arith.mulf %44, %45 : vector<8x1xf32>
      %47 = arith.mulf %43, %43 : vector<8x1xf32>
      %48 = arith.subf %46, %47 : vector<8x1xf32>
      %c0_30 = arith.constant 0 : index
      %c0_31 = arith.constant 0 : index
      %c0_32 = arith.constant 0 : index
      %49 = vector.load %arg7[%c0_30, %c0_31, %c0_32] : memref<1x8x1xf32, #tpu.memory_space<vmem>>, vector<1x8x1xf32>
      %50 = vector.shape_cast %49 : vector<1x8x1xf32> to vector<8x1xf32>
      %51 = vector.shape_cast %43 : vector<8x1xf32> to vector<1x8x1xf32>
      tpu.vector_store %arg7[%c0_30, %c0_31, %c0_32], %51 {strides = array<i32>} : memref<1x8x1xf32, #tpu.memory_space<vmem>>, vector<1x8x1xf32>,
      %cst_33 = arith.constant 0.000000e+00 : f32
      %52 = vector.broadcast %cst_33 : f32 to vector<8x1xf32>
      %53 = arith.maximumf %48, %52 : vector<8x1xf32>
      %cst_34 = arith.constant 9.99999974E-6 : f32
      %54 = vector.broadcast %cst_34 : f32 to vector<8x1xf32>
      %55 = arith.addf %53, %54 : vector<8x1xf32>
      %56 = math.rsqrt %55 : vector<8x1xf32>
      %c0_35 = arith.constant 0 : index
      %c0_36 = arith.constant 0 : index
      %c0_37 = arith.constant 0 : index
      %57 = vector.load %arg8[%c0_35, %c0_36, %c0_37] : memref<1x8x1xf32, #tpu.memory_space<vmem>>, vector<1x8x1xf32>
      %58 = vector.shape_cast %57 : vector<1x8x1xf32> to vector<8x1xf32>
      %59 = vector.shape_cast %56 : vector<8x1xf32> to vector<1x8x1xf32>
      tpu.vector_store %arg8[%c0_35, %c0_36, %c0_37], %59 {strides = array<i32>} : memref<1x8x1xf32, #tpu.memory_space<vmem>>, vector<1x8x1xf32>,
    } else {
    }
    return
  }
  func.func @transform_0(%arg0: i32, %arg1: i32) -> (i32, i32, i32) {
    %c0_i32 = arith.constant 0 : i32
    %c0_i32_0 = arith.constant 0 : i32
    return %arg0, %c0_i32, %arg1 : i32, i32, i32
  }
  func.func @transform_1(%arg0: i32, %arg1: i32) -> (i32, i32) {
    %c0_i32 = arith.constant 0 : i32
    %c0_i32_0 = arith.constant 0 : i32
    %c0_i32_1 = arith.constant 0 : i32
    return %c0_i32, %c0_i32_0 : i32, i32
  }
  func.func @transform_2(%arg0: i32, %arg1: i32) -> (i32, i32) {
    %c0_i32 = arith.constant 0 : i32
    %c0_i32_0 = arith.constant 0 : i32
    %c0_i32_1 = arith.constant 0 : i32
    return %c0_i32, %c0_i32_0 : i32, i32
  }
  func.func @transform_3(%arg0: i32, %arg1: i32) -> i32 {
    %c0_i32 = arith.constant 0 : i32
    %c0_i32_0 = arith.constant 0 : i32
    return %c0_i32 : i32
  }
  func.func @transform_4(%arg0: i32, %arg1: i32) -> (i32, i32, i32) {
    %c0_i32 = arith.constant 0 : i32
    %c0_i32_0 = arith.constant 0 : i32
    return %arg0, %c0_i32, %arg1 : i32, i32, i32
  }
  func.func @transform_5(%arg0: i32, %arg1: i32) -> (i32, i32, i32) {
    %c0_i32 = arith.constant 0 : i32
    %c0_i32_0 = arith.constant 0 : i32
    %c0_i32_1 = arith.constant 0 : i32
    return %arg0, %c0_i32, %c0_i32_0 : i32, i32, i32
  }
  func.func @transform_6(%arg0: i32, %arg1: i32) -> (i32, i32, i32) {
    %c0_i32 = arith.constant 0 : i32
    %c0_i32_0 = arith.constant 0 : i32
    %c0_i32_1 = arith.constant 0 : i32
    return %arg0, %c0_i32, %c0_i32_0 : i32, i32, i32
  }
}

module attributes {stable_mosaic.version = 11 : i64} {
  func.func @_instance_norm_kernel(%arg0: i32, %arg1: i32, %arg2: memref<1x8x2048xf32, #tpu.memory_space<vmem>>, %arg3: memref<1x8x1xf32, #tpu.memory_space<vmem>>, %arg4: memref<1x8x1xf32, #tpu.memory_space<vmem>>, %arg5: memref<1x8x2048xf32, #tpu.memory_space<vmem>>) attributes {dimension_semantics = [#tpu.dimension_semantics<parallel>, #tpu.dimension_semantics<parallel>], iteration_bounds = array<i64: 2, 2>, scalar_prefetch = 0 : i64, scratch_operands = 0 : i64, tpu.core_type = #tpu.core_type<tc>, window_params = [{transform_indices = @transform_0, window_bounds = array<i64: 1, 8, 2048>}, {transform_indices = @transform_1, window_bounds = array<i64: 1, 8, 1>}, {transform_indices = @transform_2, window_bounds = array<i64: 1, 8, 1>}, {transform_indices = @transform_3, window_bounds = array<i64: 1, 8, 2048>}]} {
    %c0 = arith.constant 0 : index
    %c0_0 = arith.constant 0 : index
    %c0_1 = arith.constant 0 : index
    %0 = vector.load %arg2[%c0, %c0_0, %c0_1] : memref<1x8x2048xf32, #tpu.memory_space<vmem>>, vector<1x8x2048xf32>
    %1 = vector.shape_cast %0 : vector<1x8x2048xf32> to vector<8x2048xf32>
    %c0_2 = arith.constant 0 : index
    %c0_3 = arith.constant 0 : index
    %c0_4 = arith.constant 0 : index
    %2 = vector.load %arg3[%c0_2, %c0_3, %c0_4] : memref<1x8x1xf32, #tpu.memory_space<vmem>>, vector<1x8x1xf32>
    %3 = vector.shape_cast %2 : vector<1x8x1xf32> to vector<8x1xf32>
    %4 = vector.broadcast %3 : vector<8x1xf32> to vector<8x2048xf32>
    %5 = arith.subf %1, %4 : vector<8x2048xf32>
    %c0_5 = arith.constant 0 : index
    %c0_6 = arith.constant 0 : index
    %c0_7 = arith.constant 0 : index
    %6 = vector.load %arg4[%c0_5, %c0_6, %c0_7] : memref<1x8x1xf32, #tpu.memory_space<vmem>>, vector<1x8x1xf32>
    %7 = vector.shape_cast %6 : vector<1x8x1xf32> to vector<8x1xf32>
    %8 = vector.broadcast %7 : vector<8x1xf32> to vector<8x2048xf32>
    %9 = arith.mulf %5, %8 : vector<8x2048xf32>
    %c0_8 = arith.constant 0 : index
    %c0_9 = arith.constant 0 : index
    %c0_10 = arith.constant 0 : index
    %10 = vector.load %arg5[%c0_8, %c0_9, %c0_10] : memref<1x8x2048xf32, #tpu.memory_space<vmem>>, vector<1x8x2048xf32>
    %11 = vector.shape_cast %10 : vector<1x8x2048xf32> to vector<8x2048xf32>
    %12 = vector.shape_cast %9 : vector<8x2048xf32> to vector<1x8x2048xf32>
    tpu.vector_store %arg5[%c0_8, %c0_9, %c0_10], %12 {strides = array<i32>} : memref<1x8x2048xf32, #tpu.memory_space<vmem>>, vector<1x8x2048xf32>,
    return
  }
  func.func @transform_0(%arg0: i32, %arg1: i32) -> (i32, i32, i32) {
    %c0_i32 = arith.constant 0 : i32
    %c0_i32_0 = arith.constant 0 : i32
    return %arg0, %c0_i32, %arg1 : i32, i32, i32
  }
  func.func @transform_1(%arg0: i32, %arg1: i32) -> (i32, i32, i32) {
    %c0_i32 = arith.constant 0 : i32
    %c0_i32_0 = arith.constant 0 : i32
    %c0_i32_1 = arith.constant 0 : i32
    return %arg0, %c0_i32, %c0_i32_0 : i32, i32, i32
  }
  func.func @transform_2(%arg0: i32, %arg1: i32) -> (i32, i32, i32) {
    %c0_i32 = arith.constant 0 : i32
    %c0_i32_0 = arith.constant 0 : i32
    %c0_i32_1 = arith.constant 0 : i32
    return %arg0, %c0_i32, %c0_i32_0 : i32, i32, i32
  }
  func.func @transform_3(%arg0: i32, %arg1: i32) -> (i32, i32, i32) {
    %c0_i32 = arith.constant 0 : i32
    %c0_i32_0 = arith.constant 0 : i32
    return %arg0, %c0_i32, %arg1 : i32, i32, i32
  }
}

</mosaic_0001>

<llo_original>
// kernel: conv3d_adn_forward.3
$region0: #{conv3d_adn_forward.3}
  #allocation0 [shape = 'u32[]', space=smem, size = 0x4, offset = 0x4, fixed_abs, tag = 'smem constant byte address 0x4 - core index']
  #allocation1 [shape = 'u32[144,128]{1,0:T(1,128)}', space=vmem, size = 0x12000, scoped, tag = 'internal scratch']
  %s0 = inlined_call_operand.vmem [shape: f32[2,8,4096], index: 0, kind: input, shape index: {}, may-alias: {0,3}]
  %s1 = inlined_call_operand.vmem [shape: f32[2,8,1], index: 1, kind: input, shape index: {}]
  %s2 = inlined_call_operand.vmem [shape: f32[2,8,1], index: 2, kind: input, shape index: {}]
  %s3 = inlined_call_operand.vmem [shape: f32[2,8,4096], index: 3, kind: output, shape index: {}, may-alias: {0,3}]
  %s4 = sld [smem:[#allocation0]]
  $region45: #{conv3d_adn_forward.3} parent=0
    _
  %s6 = ssub.s32 1, %s4
  %s7 = scalar_select 0, %s6, %s4
  loop: start=0, step=1, limit=6
  $region2: #{conv3d_adn_forward.3} parent=0 // loop_pre_header
    _
  $region3: #{conv3d_adn_forward.3} parent=0 // loop_header
    %s9 = sphi 0, %s13
    %p10 = scmp.ge.s32.totalorder %s9, 6
    %s16 = sphi 0, %s28
    %s17 = sphi 0, %s24
    %s18 = sphi 0, %s16
    %s19 = sphi 0, %s17
    %s20 = sphi 0, %s18
    %s21 = sphi 0, %s19
    %s33 = sphi 0, %s35
    %s36 = sphi 0, %s33
    %s37 = sphi 0, %s36
    %s53 = sphi 0, %s37
    %s59 = sphi 0, %s61
    %s62 = sphi 0, %s59
    %s63 = sphi 0, %s62
    %s79 = sphi 0, %s63
    %s85 = sphi 0, %s87
    %s88 = sphi 0, %s85
    %s89 = sphi 0, %s88
    %s105 = sphi 0, %s89
    %s113 = sphi 0, %s115
    %s116 = sphi 0, %s113
    %s117 = sphi 0, %s116
    %s133 = sphi 0, %s117
  $region4: #{conv3d_adn_forward.3} parent=0 // loop_header_branch
    %12 = sbr.rel (%p10) target = $region8
  $region5: #{conv3d_adn_forward.3} parent=0 // loop_body
    %s14 = ssub.s32 %s9, 1
    %s15 = ssub.s32 %s9, 2
    %s22 = sadd.s32 1, %s17
    %p23 = scmp.ge.s32.totalorder %s22, 2
    %s24 = scalar_select %p23, 0, %s22
    %s25 = sadd.s32 1, %s16
    %s26 = scalar_select %p23, %s25, %s16
    %p27 = scmp.ge.s32.totalorder %s26, 2
    %s28 = scalar_select %p27, 0, %s26
    %s29 = ssub.s32 %s16, %s28
    %s30 = ssub.s32 %s17, %s24
    %s31 = sor.u32 %s29, %s30
    %p32 = scmp.eq.s32.totalorder %s31, 0
    %s34 = sadd.s32 %s33, 1
    %s35 = scalar_select %p32, %s33, %s34
    %p38 = pneg %p32
    %p39 = scmp.eq.s32.totalorder %s9, 3
    %p40 = por %p38, %p39
    %p41 = scmp.ne.s32.totalorder %s33, %s36
    %p42 = scmp.eq.s32.totalorder %s9, 0
    %p43 = por %p41, %p42
    %p44 = scmp.ne.s32.totalorder %s33, %s36
    %p45 = scmp.eq.s32.totalorder %s14, 3
    %p46 = por %p44, %p45
    %p47 = scmp.ne.s32.totalorder %s36, %s37
    %p48 = scmp.eq.s32.totalorder %s14, 0
    %p49 = por %p47, %p48
    %p50 = scmp.ne.s32.totalorder %s36, %s37
    %p51 = scmp.eq.s32.totalorder %s15, 3
    %p52 = por %p50, %p51
    %p54 = scmp.ne.s32.totalorder %s37, %s53
    %p55 = scmp.eq.s32.totalorder %s15, 0
    %p56 = por %p54, %p55
    %s57 = ssub.s32 %s16, %s28
    %p58 = scmp.eq.s32.totalorder %s57, 0
    %s60 = sadd.s32 %s59, 1
    %s61 = scalar_select %p58, %s59, %s60
    %p64 = pneg %p58
    %p65 = scmp.eq.s32.totalorder %s9, 3
    %p66 = por %p64, %p65
    %p67 = scmp.ne.s32.totalorder %s59, %s62
    %p68 = scmp.eq.s32.totalorder %s9, 0
    %p69 = por %p67, %p68
    %p70 = scmp.ne.s32.totalorder %s59, %s62
    %p71 = scmp.eq.s32.totalorder %s14, 3
    %p72 = por %p70, %p71
    %p73 = scmp.ne.s32.totalorder %s62, %s63
    %p74 = scmp.eq.s32.totalorder %s14, 0
    %p75 = por %p73, %p74
    %p76 = scmp.ne.s32.totalorder %s62, %s63
    %p77 = scmp.eq.s32.totalorder %s15, 3
    %p78 = por %p76, %p77
    %p80 = scmp.ne.s32.totalorder %s63, %s79
    %p81 = scmp.eq.s32.totalorder %s15, 0
    %p82 = por %p80, %p81
    %s83 = ssub.s32 %s16, %s28
    %p84 = scmp.eq.s32.totalorder %s83, 0
    %s86 = sadd.s32 %s85, 1
    %s87 = scalar_select %p84, %s85, %s86
    %p90 = pneg %p84
    %p91 = scmp.eq.s32.totalorder %s9, 3
    %p92 = por %p90, %p91
    %p93 = scmp.ne.s32.totalorder %s85, %s88
    %p94 = scmp.eq.s32.totalorder %s9, 0
    %p95 = por %p93, %p94
    %p96 = scmp.ne.s32.totalorder %s85, %s88
    %p97 = scmp.eq.s32.totalorder %s14, 3
    %p98 = por %p96, %p97
    %p99 = scmp.ne.s32.totalorder %s88, %s89
    %p100 = scmp.eq.s32.totalorder %s14, 0
    %p101 = por %p99, %p100
    %p102 = scmp.ne.s32.totalorder %s88, %s89
    %p103 = scmp.eq.s32.totalorder %s15, 3
    %p104 = por %p102, %p103
    %p106 = scmp.ne.s32.totalorder %s89, %s105
    %p107 = scmp.eq.s32.totalorder %s15, 0
    %p108 = por %p106, %p107
    %s109 = ssub.s32 %s16, %s28
    %s110 = ssub.s32 %s17, %s24
    %s111 = sor.u32 %s109, %s110
    %p112 = scmp.eq.s32.totalorder %s111, 0
    %s114 = sadd.s32 %s113, 1
    %s115 = scalar_select %p112, %s113, %s114
    %p118 = pneg %p112
    %p119 = scmp.eq.s32.totalorder %s9, 3
    %p120 = por %p118, %p119
    %p121 = scmp.ne.s32.totalorder %s113, %s116
    %p122 = scmp.eq.s32.totalorder %s9, 0
    %p123 = por %p121, %p122
    %p124 = scmp.ne.s32.totalorder %s113, %s116
    %p125 = scmp.eq.s32.totalorder %s14, 3
    %p126 = por %p124, %p125
    %p127 = scmp.ne.s32.totalorder %s116, %s117
    %p128 = scmp.eq.s32.totalorder %s14, 0
    %p129 = por %p127, %p128
    %p130 = scmp.ne.s32.totalorder %s116, %s117
    %p131 = scmp.eq.s32.totalorder %s15, 3
    %p132 = por %p130, %p131
    %p134 = scmp.ne.s32.totalorder %s117, %s133
    %p135 = scmp.eq.s32.totalorder %s15, 0
    %p136 = por %p134, %p135
    %p137 = scmp.le.s32.totalorder 1, %s9
    %p138 = scmp.lt.s32.totalorder %s9, 5
    %p139 = pnand %p137, %p138
    %p140 = pneg %p139
    // Predicated region
    $region9: #{conv3d_adn_forward.3} parent=5 // pred_check
      _
    $region10: #{conv3d_adn_forward.3} parent=5 // pred_check_branch
      %142 = sbr.rel (%p139) target = $region12
    $region11: #{conv3d_adn_forward.3} parent=5 // pred_region
      %s143 = ssub.s32 %s9, 1
    $region12: #{conv3d_adn_forward.3} parent=5 // pred_fallthru
      _
    %p144 = scmp.lt.s32.totalorder %s9, 4
    // Predicated region
    $region13: #{conv3d_adn_forward.3} parent=5 // pred_check
      %p145 = pneg %p144
    $region14: #{conv3d_adn_forward.3} parent=5 // pred_check_branch
      %147 = sbr.rel (%p145) target = $region16
    $region15: #{conv3d_adn_forward.3} parent=5 // pred_region
      // Predicated region
      $region17: #{conv3d_adn_forward.3} parent=15 // pred_check
        %p148 = pneg %p43
      $region18: #{conv3d_adn_forward.3} parent=15 // pred_check_branch
        %150 = sbr.rel (%p148) target = $region20
      $region19: #{conv3d_adn_forward.3} parent=15 // pred_region
        %s151 = smul.u32 16, %s17
        %p152 = scmp.lt.s32.totalorder %s16, 1
        %s153 = scalar_select %p152, %s16, 1
        %p154 = scmp.lt.s32.totalorder %s151, 31
        %s155 = scalar_select %p154, %s151, 31
        %s156 = smul.addr %s153, 32
        %s157 = sadd.s32 %s155, %s156
        %s158 = smul.addr %s157, 8
        %s159 = scalar_lea.vmem %s0, %s158
        %s160 = smul.u32 16, %s17
      $region20: #{conv3d_adn_forward.3} parent=15 // pred_fallthru
        _
      // Predicated region
      $region21: #{conv3d_adn_forward.3} parent=15 // pred_check
        %p161 = pneg %p69
      $region22: #{conv3d_adn_forward.3} parent=15 // pred_check_branch
        %163 = sbr.rel (%p161) target = $region24
      $region23: #{conv3d_adn_forward.3} parent=15 // pred_region
        %p164 = scmp.lt.s32.totalorder %s16, 1
        %s165 = scalar_select %p164, %s16, 1
        %s166 = smul.addr %s165, 8
        %s167 = scalar_lea.vmem %s1, %s166
      $region24: #{conv3d_adn_forward.3} parent=15 // pred_fallthru
        _
      // Predicated region
      $region25: #{conv3d_adn_forward.3} parent=15 // pred_check
        %p168 = pneg %p95
      $region26: #{conv3d_adn_forward.3} parent=15 // pred_check_branch
        %170 = sbr.rel (%p168) target = $region28
      $region27: #{conv3d_adn_forward.3} parent=15 // pred_region
        %p171 = scmp.lt.s32.totalorder %s16, 1
        %s172 = scalar_select %p171, %s16, 1
        %s173 = smul.addr %s172, 8
        %s174 = scalar_lea.vmem %s2, %s173
      $region28: #{conv3d_adn_forward.3} parent=15 // pred_fallthru
        _
    $region16: #{conv3d_adn_forward.3} parent=5 // pred_fallthru
      _
    %p175 = scmp.le.s32.totalorder 1, %s9
    %p176 = scmp.lt.s32.totalorder %s9, 5
    %p177 = pnand %p175, %p176
    %p178 = pneg %p177
    // Predicated region
    $region29: #{conv3d_adn_forward.3} parent=5 // pred_check
      _
    $region30: #{conv3d_adn_forward.3} parent=5 // pred_check_branch
      %180 = sbr.rel (%p177) target = $region32
    $region31: #{conv3d_adn_forward.3} parent=5 // pred_region
      %s181 = ssub.s32 %s9, 1
      %s182 = smul.u32 16, %s19
      %p183 = scmp.lt.s32.totalorder %s18, 1
      %s184 = scalar_select %p183, %s18, 1
      %p185 = scmp.lt.s32.totalorder %s182, 31
      %s186 = scalar_select %p185, %s182, 31
      %s187 = smul.addr %s184, 32
      %s188 = sadd.s32 %s186, %s187
      %s189 = smul.addr %s188, 8
      %s190 = scalar_lea.vmem %s0, %s189
      %p191 = pneg %p49
      %p192 = pneg %p46
      %p193 = scmp.lt.s32.totalorder %s18, 1
      %s194 = scalar_select %p193, %s18, 1
      %s195 = smul.addr %s194, 8
      %s196 = scalar_lea.vmem %s1, %s195
      %p197 = pneg %p75
      %p198 = pneg %p72
      %p199 = scmp.lt.s32.totalorder %s18, 1
      %s200 = scalar_select %p199, %s18, 1
      %s201 = smul.addr %s200, 8
      %s202 = scalar_lea.vmem %s2, %s201
      %p203 = pneg %p101
      %p204 = pneg %p98
      %p205 = pneg %p129
      %p206 = pneg %p126
      %s207 = smul.u32 16, %s19
      %p208 = scmp.lt.s32.totalorder %s18, 1
      %s209 = scalar_select %p208, %s18, 1
      %p210 = scmp.lt.s32.totalorder %s207, 31
      %s211 = scalar_select %p210, %s207, 31
      %s212 = smul.addr %s209, 32
      %s213 = sadd.s32 %s211, %s212
      %s214 = smul.addr %s213, 8
      %s215 = scalar_lea.vmem %s3, %s214
      %s216 = smul.u32 16, %s19
      %p217 = scmp.lt.s32.totalorder %s18, 1
      %s218 = scalar_select %p217, %s18, 1
      %p219 = scmp.lt.s32.totalorder %s216, 31
      %s220 = scalar_select %p219, %s216, 31
      %s221 = smul.addr %s218, 32
      %s222 = sadd.s32 %s220, %s221
      %s223 = smul.addr %s222, 8
      %s224 = scalar_lea.vmem %s0, %s223
      %s225 = smul.u32 16, %s19
      %p226 = scmp.lt.s32.totalorder %s18, 1
      %s227 = scalar_select %p226, %s18, 1
      %s228 = smul.addr %s227, 8
      %s229 = scalar_lea.vmem %s1, %s228
      %p230 = scmp.lt.s32.totalorder %s18, 1
      %s231 = scalar_select %p230, %s18, 1
      %s232 = smul.addr %s231, 8
      %s233 = scalar_lea.vmem %s2, %s232
      %s234 = smul.u32 16, %s19
      %p235 = scmp.lt.s32.totalorder %s18, 1
      %s236 = scalar_select %p235, %s18, 1
      %p237 = scmp.lt.s32.totalorder %s234, 31
      %s238 = scalar_select %p237, %s234, 31
      %s239 = smul.addr %s236, 32
      %s240 = sadd.s32 %s238, %s239
      %s241 = smul.addr %s240, 8
      %s242 = scalar_lea.vmem %s3, %s241
      %s243 = smul.u32 16, %s19
      %v244 = vld [vmem:[%s224] sm:$0xff]
      %v245 = vld [vmem:[%s224 + $0x8] sm:$0xff]
      %v246 = vld [vmem:[%s224 + $0x10] sm:$0xff]
      %v247 = vld [vmem:[%s224 + $0x18] sm:$0xff]
      %v248 = vld [vmem:[%s224 + $0x20] sm:$0xff]
      %v249 = vld [vmem:[%s224 + $0x28] sm:$0xff]
      %v250 = vld [vmem:[%s224 + $0x30] sm:$0xff]
      %v251 = vld [vmem:[%s224 + $0x38] sm:$0xff]
      %v252 = vld [vmem:[%s224 + $0x40] sm:$0xff]
      %v253 = vld [vmem:[%s224 + $0x48] sm:$0xff]
      %v254 = vld [vmem:[%s224 + $0x50] sm:$0xff]
      %v255 = vld [vmem:[%s224 + $0x58] sm:$0xff]
      %v256 = vld [vmem:[%s224 + $0x60] sm:$0xff]
      %v257 = vld [vmem:[%s224 + $0x68] sm:$0xff]
      %v258 = vld [vmem:[%s224 + $0x70] sm:$0xff]
      %v259 = vld [vmem:[%s224 + $0x78] sm:$0xff]
      %v260 = vld [vmem:[%s229] sm:$0xff]
      %262 = vset.pattern.permute.xlu0 0
      %263 = vperm.xlu0 %262, %v260
      %v264 = vpop.permute.xlu0 %263
      %v266 = vsub.f32 %v244, %v264
      %v267 = vsub.f32 %v245, %v264
      %v268 = vsub.f32 %v246, %v264
      %v269 = vsub.f32 %v247, %v264
      %v270 = vsub.f32 %v248, %v264
      %v271 = vsub.f32 %v249, %v264
      %v272 = vsub.f32 %v250, %v264
      %v273 = vsub.f32 %v251, %v264
      %v274 = vsub.f32 %v252, %v264
      %v275 = vsub.f32 %v253, %v264
      %v276 = vsub.f32 %v254, %v264
      %v277 = vsub.f32 %v255, %v264
      %v278 = vsub.f32 %v256, %v264
      %v279 = vsub.f32 %v257, %v264
      %v280 = vsub.f32 %v258, %v264
      %v281 = vsub.f32 %v259, %v264
      %v282 = vld [vmem:[%s233] sm:$0xff]
      %284 = vset.pattern.permute.xlu0 0
      %285 = vperm.xlu0 %284, %v282
      %v286 = vpop.permute.xlu0 %285
      %v288 = vmul.f32 %v266, %v286
      %v289 = vmul.f32 %v267, %v286
      %v290 = vmul.f32 %v268, %v286
      %v291 = vmul.f32 %v269, %v286
      %v292 = vmul.f32 %v270, %v286
      %v293 = vmul.f32 %v271, %v286
      %v294 = vmul.f32 %v272, %v286
      %v295 = vmul.f32 %v273, %v286
      %v296 = vmul.f32 %v274, %v286
      %v297 = vmul.f32 %v275, %v286
      %v298 = vmul.f32 %v276, %v286
      %v299 = vmul.f32 %v277, %v286
      %v300 = vmul.f32 %v278, %v286
      %v301 = vmul.f32 %v279, %v286
      %v302 = vmul.f32 %v280, %v286
      %v303 = vmul.f32 %v281, %v286
      %304 = vst [vmem:[%s242] sm:$0xff] %v288
      %305 = vst [vmem:[%s242 + $0x8] sm:$0xff] %v289
      %306 = vst [vmem:[%s242 + $0x10] sm:$0xff] %v290
      %307 = vst [vmem:[%s242 + $0x18] sm:$0xff] %v291
      %308 = vst [vmem:[%s242 + $0x20] sm:$0xff] %v292
      %309 = vst [vmem:[%s242 + $0x28] sm:$0xff] %v293
      %310 = vst [vmem:[%s242 + $0x30] sm:$0xff] %v294
      %311 = vst [vmem:[%s242 + $0x38] sm:$0xff] %v295
      %312 = vst [vmem:[%s242 + $0x40] sm:$0xff] %v296
      %313 = vst [vmem:[%s242 + $0x48] sm:$0xff] %v297
      %314 = vst [vmem:[%s242 + $0x50] sm:$0xff] %v298
      %315 = vst [vmem:[%s242 + $0x58] sm:$0xff] %v299
      %316 = vst [vmem:[%s242 + $0x60] sm:$0xff] %v300
      %317 = vst [vmem:[%s242 + $0x68] sm:$0xff] %v301
      %318 = vst [vmem:[%s242 + $0x70] sm:$0xff] %v302
      %319 = vst [vmem:[%s242 + $0x78] sm:$0xff] %v303
      %s320 = smul.u32 16, %s19
      %p321 = scmp.lt.s32.totalorder %s18, 1
      %s322 = scalar_select %p321, %s18, 1
      %p323 = scmp.lt.s32.totalorder %s320, 31
      %s324 = scalar_select %p323, %s320, 31
      %s325 = smul.addr %s322, 32
      %s326 = sadd.s32 %s324, %s325
      %s327 = smul.addr %s326, 8
      %s328 = scalar_lea.vmem %s3, %s327
      // Predicated region
      $region33: #{conv3d_adn_forward.3} parent=31 // pred_check
        %p329 = pneg %p126
      $region34: #{conv3d_adn_forward.3} parent=31 // pred_check_branch
        %331 = sbr.rel (%p329) target = $region36
      $region35: #{conv3d_adn_forward.3} parent=31 // pred_region
        %s332 = smul.u32 16, %s19
      $region36: #{conv3d_adn_forward.3} parent=31 // pred_fallthru
        _
    $region32: #{conv3d_adn_forward.3} parent=5 // pred_fallthru
      _
    %p333 = scmp.le.s32.totalorder 2, %s9
    // Predicated region
    $region37: #{conv3d_adn_forward.3} parent=5 // pred_check
      %p334 = pneg %p333
    $region38: #{conv3d_adn_forward.3} parent=5 // pred_check_branch
      %336 = sbr.rel (%p334) target = $region40
    $region39: #{conv3d_adn_forward.3} parent=5 // pred_region
      %s337 = ssub.s32 %s9, 2
      // Predicated region
      $region41: #{conv3d_adn_forward.3} parent=39 // pred_check
        %p338 = pneg %p132
      $region42: #{conv3d_adn_forward.3} parent=39 // pred_check_branch
        %340 = sbr.rel (%p338) target = $region44
      $region43: #{conv3d_adn_forward.3} parent=39 // pred_region
        %s341 = smul.u32 16, %s21
        %p342 = scmp.lt.s32.totalorder %s20, 1
        %s343 = scalar_select %p342, %s20, 1
        %p344 = scmp.lt.s32.totalorder %s341, 31
        %s345 = scalar_select %p344, %s341, 31
        %s346 = smul.addr %s343, 32
        %s347 = sadd.s32 %s345, %s346
        %s348 = smul.addr %s347, 8
        %s349 = scalar_lea.vmem %s3, %s348
      $region44: #{conv3d_adn_forward.3} parent=39 // pred_fallthru
        _
    $region40: #{conv3d_adn_forward.3} parent=5 // pred_fallthru
      _
  $region6: #{conv3d_adn_forward.3} parent=0 // loop_footer
    %s13 = sadd.s32 1, %s9
  $region7: #{conv3d_adn_forward.3} parent=0 // loop_footer_branch
    %8 = sbr.rel target = $region3
  $region8: #{conv3d_adn_forward.3} parent=0 // loop_exit
    _

// kernel: conv3d_adn_forward.2
$region0: #{conv3d_adn_forward.2}
  #allocation0 [shape = 'u32[]', space=smem, size = 0x4, offset = 0x4, fixed_abs, tag = 'smem constant byte address 0x4 - core index']
  #allocation1 [shape = 'u32[144,128]{1,0:T(1,128)}', space=vmem, size = 0x12000, scoped, tag = 'internal scratch']
  #allocation2 [shape = 'f32[8,1]{1,0:T(8,128)}', space=vmem, size = 0x1000, scoped, tag = 'scratch operand']
  #allocation3 [shape = 'f32[8,1]{1,0:T(8,128)}', space=vmem, size = 0x1000, scoped, tag = 'scratch operand']
  #allocation4 [shape = 'f32[1]{0:T(128)S(6)}', space=smem, size = 0x200, scoped, tag = 'scoped memory for conv3d_adn_forward.2']
  %s0 = inlined_call_operand.vmem [shape: bf16[2,112,4096], index: 0, kind: input, shape index: {}]
  %s1 = inlined_call_operand.vmem [shape: bf16[8,112], index: 1, kind: input, shape index: {}]
  %s2 = inlined_call_operand.vmem [shape: f32[8,1], index: 2, kind: input, shape index: {}]
  %s3 = inlined_call_operand.<no memory space> [shape: f32[1], index: 3, kind: input, shape index: {}]
  %s4 = inlined_call_operand.vmem [shape: f32[2,8,4096], index: 4, kind: output, shape index: {0}]
  %s5 = inlined_call_operand.vmem [shape: f32[2,8,1], index: 5, kind: output, shape index: {1}]
  %s6 = inlined_call_operand.vmem [shape: f32[2,8,1], index: 6, kind: output, shape index: {2}]
  %7 = xla_tuple %s4, %s5, %s6
  %s8 = sld [smem:[#allocation0]]
  $region96: #{conv3d_adn_forward.2} parent=0
    _
  %s10 = ssub.s32 1, %s8
  %s11 = scalar_select 0, %s10, %s8
  %12 = sst [smem:[#allocation4]] %s3
  $region1: #{conv3d_adn_forward.2} parent=0
    #allocation5 [shape = 'u8[917504]{0}', space=vmem, size = 0xe0000, scoped, tag = 'input window, operand 0']
    loop: start=0, step=1, limit=6
    $region2: #{conv3d_adn_forward.2} parent=1 // loop_pre_header
      _
    $region3: #{conv3d_adn_forward.2} parent=1 // loop_header
      %s14 = sphi 0, %s18
      %p15 = scmp.ge.s32.totalorder %s14, 6
      %s21 = sphi 0, %s33
      %s22 = sphi 0, %s29
      %s23 = sphi 0, %s21
      %s24 = sphi 0, %s22
      %s25 = sphi 0, %s23
      %s26 = sphi 0, %s24
      %s38 = sphi 0, %s40
      %s41 = sphi 0, %s38
      %s42 = sphi 0, %s41
      %s58 = sphi 0, %s42
      %s62 = sphi 0, %s62
      %s64 = sphi 0, %s62
      %s65 = sphi 0, %s64
      %s79 = sphi 0, %s65
      %s83 = sphi 0, %s83
      %s85 = sphi 0, %s83
      %s86 = sphi 0, %s85
      %s100 = sphi 0, %s86
      %s104 = sphi 0, %s104
      %s106 = sphi 0, %s104
      %s107 = sphi 0, %s106
      %s121 = sphi 0, %s107
      %s129 = sphi 0, %s131
      %s132 = sphi 0, %s129
      %s133 = sphi 0, %s132
      %s149 = sphi 0, %s133
      %s155 = sphi 0, %s157
      %s158 = sphi 0, %s155
      %s159 = sphi 0, %s158
      %s175 = sphi 0, %s159
      %s181 = sphi 0, %s183
      %s184 = sphi 0, %s181
      %s185 = sphi 0, %s184
      %s201 = sphi 0, %s185
    $region4: #{conv3d_adn_forward.2} parent=1 // loop_header_branch
      %17 = sbr.rel (%p15) target = $region8
    $region5: #{conv3d_adn_forward.2} parent=1 // loop_body
      %s19 = ssub.s32 %s14, 1
      %s20 = ssub.s32 %s14, 2
      %s27 = sadd.s32 1, %s22
      %p28 = scmp.ge.s32.totalorder %s27, 2
      %s29 = scalar_select %p28, 0, %s27
      %s30 = sadd.s32 1, %s21
      %s31 = scalar_select %p28, %s30, %s21
      %p32 = scmp.ge.s32.totalorder %s31, 2
      %s33 = scalar_select %p32, 0, %s31
      %s34 = ssub.s32 %s21, %s33
      %s35 = ssub.s32 %s22, %s29
      %s36 = sor.u32 %s34, %s35
      %p37 = scmp.eq.s32.totalorder %s36, 0
      %s39 = sadd.s32 %s38, 1
      %s40 = scalar_select %p37, %s38, %s39
      %p43 = pneg %p37
      %p44 = scmp.eq.s32.totalorder %s14, 3
      %p45 = por %p43, %p44
      %p46 = scmp.ne.s32.totalorder %s38, %s41
      %p47 = scmp.eq.s32.totalorder %s14, 0
      %p48 = por %p46, %p47
      %p49 = scmp.ne.s32.totalorder %s38, %s41
      %p50 = scmp.eq.s32.totalorder %s19, 3
      %p51 = por %p49, %p50
      %p52 = scmp.ne.s32.totalorder %s41, %s42
      %p53 = scmp.eq.s32.totalorder %s19, 0
      %p54 = por %p52, %p53
      %p55 = scmp.ne.s32.totalorder %s41, %s42
      %p56 = scmp.eq.s32.totalorder %s20, 3
      %p57 = por %p55, %p56
      %p59 = scmp.ne.s32.totalorder %s42, %s58
      %p60 = scmp.eq.s32.totalorder %s20, 0
      %p61 = por %p59, %p60
      %s63 = sadd.s32 %s62, 1
      %p66 = scmp.eq.s32.totalorder %s14, 3
      %p67 = scmp.ne.s32.totalorder %s62, %s64
      %p68 = scmp.eq.s32.totalorder %s14, 0
      %p69 = por %p67, %p68
      %p70 = scmp.ne.s32.totalorder %s62, %s64
      %p71 = scmp.eq.s32.totalorder %s19, 3
      %p72 = por %p70, %p71
      %p73 = scmp.ne.s32.totalorder %s64, %s65
      %p74 = scmp.eq.s32.totalorder %s19, 0
      %p75 = por %p73, %p74
      %p76 = scmp.ne.s32.totalorder %s64, %s65
      %p77 = scmp.eq.s32.totalorder %s20, 3
      %p78 = por %p76, %p77
      %p80 = scmp.ne.s32.totalorder %s65, %s79
      %p81 = scmp.eq.s32.totalorder %s20, 0
      %p82 = por %p80, %p81
      %s84 = sadd.s32 %s83, 1
      %p87 = scmp.eq.s32.totalorder %s14, 3
      %p88 = scmp.ne.s32.totalorder %s83, %s85
      %p89 = scmp.eq.s32.totalorder %s14, 0
      %p90 = por %p88, %p89
      %p91 = scmp.ne.s32.totalorder %s83, %s85
      %p92 = scmp.eq.s32.totalorder %s19, 3
      %p93 = por %p91, %p92
      %p94 = scmp.ne.s32.totalorder %s85, %s86
      %p95 = scmp.eq.s32.totalorder %s19, 0
      %p96 = por %p94, %p95
      %p97 = scmp.ne.s32.totalorder %s85, %s86
      %p98 = scmp.eq.s32.totalorder %s20, 3
      %p99 = por %p97, %p98
      %p101 = scmp.ne.s32.totalorder %s86, %s100
      %p102 = scmp.eq.s32.totalorder %s20, 0
      %p103 = por %p101, %p102
      %s105 = sadd.s32 %s104, 1
      %p108 = scmp.eq.s32.totalorder %s14, 3
      %p109 = scmp.ne.s32.totalorder %s104, %s106
      %p110 = scmp.eq.s32.totalorder %s14, 0
      %p111 = por %p109, %p110
      %p112 = scmp.ne.s32.totalorder %s104, %s106
      %p113 = scmp.eq.s32.totalorder %s19, 3
      %p114 = por %p112, %p113
      %p115 = scmp.ne.s32.totalorder %s106, %s107
      %p116 = scmp.eq.s32.totalorder %s19, 0
      %p117 = por %p115, %p116
      %p118 = scmp.ne.s32.totalorder %s106, %s107
      %p119 = scmp.eq.s32.totalorder %s20, 3
      %p120 = por %p118, %p119
      %p122 = scmp.ne.s32.totalorder %s107, %s121
      %p123 = scmp.eq.s32.totalorder %s20, 0
      %p124 = por %p122, %p123
      %s125 = ssub.s32 %s21, %s33
      %s126 = ssub.s32 %s22, %s29
      %s127 = sor.u32 %s125, %s126
      %p128 = scmp.eq.s32.totalorder %s127, 0
      %s130 = sadd.s32 %s129, 1
      %s131 = scalar_select %p128, %s129, %s130
      %p134 = pneg %p128
      %p135 = scmp.eq.s32.totalorder %s14, 3
      %p136 = por %p134, %p135
      %p137 = scmp.ne.s32.totalorder %s129, %s132
      %p138 = scmp.eq.s32.totalorder %s14, 0
      %p139 = por %p137, %p138
      %p140 = scmp.ne.s32.totalorder %s129, %s132
      %p141 = scmp.eq.s32.totalorder %s19, 3
      %p142 = por %p140, %p141
      %p143 = scmp.ne.s32.totalorder %s132, %s133
      %p144 = scmp.eq.s32.totalorder %s19, 0
      %p145 = por %p143, %p144
      %p146 = scmp.ne.s32.totalorder %s132, %s133
      %p147 = scmp.eq.s32.totalorder %s20, 3
      %p148 = por %p146, %p147
      %p150 = scmp.ne.s32.totalorder %s133, %s149
      %p151 = scmp.eq.s32.totalorder %s20, 0
      %p152 = por %p150, %p151
      %s153 = ssub.s32 %s21, %s33
      %p154 = scmp.eq.s32.totalorder %s153, 0
      %s156 = sadd.s32 %s155, 1
      %s157 = scalar_select %p154, %s155, %s156
      %p160 = pneg %p154
      %p161 = scmp.eq.s32.totalorder %s14, 3
      %p162 = por %p160, %p161
      %p163 = scmp.ne.s32.totalorder %s155, %s158
      %p164 = scmp.eq.s32.totalorder %s14, 0
      %p165 = por %p163, %p164
      %p166 = scmp.ne.s32.totalorder %s155, %s158
      %p167 = scmp.eq.s32.totalorder %s19, 3
      %p168 = por %p166, %p167
      %p169 = scmp.ne.s32.totalorder %s158, %s159
      %p170 = scmp.eq.s32.totalorder %s19, 0
      %p171 = por %p169, %p170
      %p172 = scmp.ne.s32.totalorder %s158, %s159
      %p173 = scmp.eq.s32.totalorder %s20, 3
      %p174 = por %p172, %p173
      %p176 = scmp.ne.s32.totalorder %s159, %s175
      %p177 = scmp.eq.s32.totalorder %s20, 0
      %p178 = por %p176, %p177
      %s179 = ssub.s32 %s21, %s33
      %p180 = scmp.eq.s32.totalorder %s179, 0
      %s182 = sadd.s32 %s181, 1
      %s183 = scalar_select %p180, %s181, %s182
      %p186 = pneg %p180
      %p187 = scmp.eq.s32.totalorder %s14, 3
      %p188 = por %p186, %p187
      %p189 = scmp.ne.s32.totalorder %s181, %s184
      %p190 = scmp.eq.s32.totalorder %s14, 0
      %p191 = por %p189, %p190
      %p192 = scmp.ne.s32.totalorder %s181, %s184
      %p193 = scmp.eq.s32.totalorder %s19, 3
      %p194 = por %p192, %p193
      %p195 = scmp.ne.s32.totalorder %s184, %s185
      %p196 = scmp.eq.s32.totalorder %s19, 0
      %p197 = por %p195, %p196
      %p198 = scmp.ne.s32.totalorder %s184, %s185
      %p199 = scmp.eq.s32.totalorder %s20, 3
      %p200 = por %p198, %p199
      %p202 = scmp.ne.s32.totalorder %s185, %s201
      %p203 = scmp.eq.s32.totalorder %s20, 0
      %p204 = por %p202, %p203
      %p205 = scmp.le.s32.totalorder 1, %s14
      %p206 = scmp.lt.s32.totalorder %s14, 5
      %p207 = pnand %p205, %p206
      %p208 = pneg %p207
      // Predicated region
      $region9: #{conv3d_adn_forward.2} parent=5 // pred_check
        _
      $region10: #{conv3d_adn_forward.2} parent=5 // pred_check_branch
        %210 = sbr.rel (%p207) target = $region12
      $region11: #{conv3d_adn_forward.2} parent=5 // pred_region
        %s211 = ssub.s32 %s14, 1
        // Predicated region
        $region13: #{conv3d_adn_forward.2} parent=11 // pred_check
          %p212 = pneg %p75
        $region14: #{conv3d_adn_forward.2} parent=11 // pred_check_branch
          %214 = sbr.rel (%p212) target = $region16
        $region15: #{conv3d_adn_forward.2} parent=11 // pred_region
          _
        $region16: #{conv3d_adn_forward.2} parent=11 // pred_fallthru
          _
        // Predicated region
        $region17: #{conv3d_adn_forward.2} parent=11 // pred_check
          %p215 = pneg %p96
        $region18: #{conv3d_adn_forward.2} parent=11 // pred_check_branch
          %217 = sbr.rel (%p215) target = $region20
        $region19: #{conv3d_adn_forward.2} parent=11 // pred_region
          _
        $region20: #{conv3d_adn_forward.2} parent=11 // pred_fallthru
          _
        // Predicated region
        $region21: #{conv3d_adn_forward.2} parent=11 // pred_check
          %p218 = pneg %p117
        $region22: #{conv3d_adn_forward.2} parent=11 // pred_check_branch
          %220 = sbr.rel (%p218) target = $region24
        $region23: #{conv3d_adn_forward.2} parent=11 // pred_region
          _
        $region24: #{conv3d_adn_forward.2} parent=11 // pred_fallthru
          _
      $region12: #{conv3d_adn_forward.2} parent=5 // pred_fallthru
        _
      %p221 = scmp.lt.s32.totalorder %s14, 4
      // Predicated region
      $region25: #{conv3d_adn_forward.2} parent=5 // pred_check
        %p222 = pneg %p221
      $region26: #{conv3d_adn_forward.2} parent=5 // pred_check_branch
        %224 = sbr.rel (%p222) target = $region28
      $region27: #{conv3d_adn_forward.2} parent=5 // pred_region
        // Predicated region
        $region29: #{conv3d_adn_forward.2} parent=27 // pred_check
          %p225 = pneg %p48
        $region30: #{conv3d_adn_forward.2} parent=27 // pred_check_branch
          %227 = sbr.rel (%p225) target = $region32
        $region31: #{conv3d_adn_forward.2} parent=27 // pred_region
          %s228 = sand.u32 %s38, 1
          %s229 = sand.u32 %s38, 1
          %s230 = smul.addr %s229, 896
          %s231 = scalar_lea.vmem [#allocation5], %s230
          %s232 = smul.u32 16, %s22
          %s233 = smul.addr %s21, 448
          %s234 = sadd.s32 %s232, %s233
          %s235 = smul.addr %s234, 4
          %s236 = scalar_lea.vmem %s0, %s235
          // Predicated region
          $region33: #{conv3d_adn_forward.2} parent=31 // pred_check
            _
          $region34: #{conv3d_adn_forward.2} parent=31 // pred_check_branch
            %238 = sbr.rel (0) target = $region36
          $region35: #{conv3d_adn_forward.2} parent=31 // pred_region
            // Predicated region
            $region37: #{conv3d_adn_forward.2} parent=35 // pred_check
              _
            $region38: #{conv3d_adn_forward.2} parent=35 // pred_check_branch
              %240 = sbr.rel (0) target = $region40
            $region39: #{conv3d_adn_forward.2} parent=35 // pred_region
              loop: start=0, step=1, limit=1
              $region41: #{conv3d_adn_forward.2} parent=39 // loop_pre_header
                _
              $region42: #{conv3d_adn_forward.2} parent=39 // loop_header
                %s242 = sphi 0, %s246
                %p243 = scmp.ge.s32.totalorder %s242, 1
                %s247 = sphi %s236, %s236
                %s248 = sphi %s231, %s231
              $region43: #{conv3d_adn_forward.2} parent=39 // loop_header_branch
                %245 = sbr.rel (%p243) target = $region47
              $region44: #{conv3d_adn_forward.2} parent=39 // loop_body
                %v249 = vld [vmem:[%s247] sm:$0xff]
                %250 = vst [vmem:[%s248] sm:$0xff] %v249
                %v251 = vld [vmem:[%s247 + $0x8] sm:$0xff]
                %252 = vst [vmem:[%s248 + $0x8] sm:$0xff] %v251
                %v253 = vld [vmem:[%s247 + $0x10] sm:$0xff]
                %254 = vst [vmem:[%s248 + $0x10] sm:$0xff] %v253
                %v255 = vld [vmem:[%s247 + $0x18] sm:$0xff]
                %256 = vst [vmem:[%s248 + $0x18] sm:$0xff] %v255
                %v257 = vld [vmem:[%s247 + $0x20] sm:$0xff]
                %258 = vst [vmem:[%s248 + $0x20] sm:$0xff] %v257
                %v259 = vld [vmem:[%s247 + $0x28] sm:$0xff]
                %260 = vst [vmem:[%s248 + $0x28] sm:$0xff] %v259
                %v261 = vld [vmem:[%s247 + $0x30] sm:$0xff]
                %262 = vst [vmem:[%s248 + $0x30] sm:$0xff] %v261
                %v263 = vld [vmem:[%s247 + $0x38] sm:$0xff]
                %264 = vst [vmem:[%s248 + $0x38] sm:$0xff] %v263
                %v265 = vld [vmem:[%s247 + $0x80] sm:$0xff]
                %266 = vst [vmem:[%s248 + $0x40] sm:$0xff] %v265
                %v267 = vld [vmem:[%s247 + $0x88] sm:$0xff]
                %268 = vst [vmem:[%s248 + $0x48] sm:$0xff] %v267
                %v269 = vld [vmem:[%s247 + $0x90] sm:$0xff]
                %270 = vst [vmem:[%s248 + $0x50] sm:$0xff] %v269
                %v271 = vld [vmem:[%s247 + $0x98] sm:$0xff]
                %272 = vst [vmem:[%s248 + $0x58] sm:$0xff] %v271
                %v273 = vld [vmem:[%s247 + $0xa0] sm:$0xff]
                %274 = vst [vmem:[%s248 + $0x60] sm:$0xff] %v273
                %v275 = vld [vmem:[%s247 + $0xa8] sm:$0xff]
                %276 = vst [vmem:[%s248 + $0x68] sm:$0xff] %v275
                %v277 = vld [vmem:[%s247 + $0xb0] sm:$0xff]
                %278 = vst [vmem:[%s248 + $0x70] sm:$0xff] %v277
                %v279 = vld [vmem:[%s247 + $0xb8] sm:$0xff]
                %280 = vst [vmem:[%s248 + $0x78] sm:$0xff] %v279
                %v281 = vld [vmem:[%s247 + $0x100] sm:$0xff]
                %282 = vst [vmem:[%s248 + $0x80] sm:$0xff] %v281
                %v283 = vld [vmem:[%s247 + $0x108] sm:$0xff]
                %284 = vst [vmem:[%s248 + $0x88] sm:$0xff] %v283
                %v285 = vld [vmem:[%s247 + $0x110] sm:$0xff]
                %286 = vst [vmem:[%s248 + $0x90] sm:$0xff] %v285
                %v287 = vld [vmem:[%s247 + $0x118] sm:$0xff]
                %288 = vst [vmem:[%s248 + $0x98] sm:$0xff] %v287
                %v289 = vld [vmem:[%s247 + $0x120] sm:$0xff]
                %290 = vst [vmem:[%s248 + $0xa0] sm:$0xff] %v289
                %v291 = vld [vmem:[%s247 + $0x128] sm:$0xff]
                %292 = vst [vmem:[%s248 + $0xa8] sm:$0xff] %v291
                %v293 = vld [vmem:[%s247 + $0x130] sm:$0xff]
                %294 = vst [vmem:[%s248 + $0xb0] sm:$0xff] %v293
                %v295 = vld [vmem:[%s247 + $0x138] sm:$0xff]
                %296 = vst [vmem:[%s248 + $0xb8] sm:$0xff] %v295
                %v297 = vld [vmem:[%s247 + $0x180] sm:$0xff]
                %298 = vst [vmem:[%s248 + $0xc0] sm:$0xff] %v297
                %v299 = vld [vmem:[%s247 + $0x188] sm:$0xff]
                %300 = vst [vmem:[%s248 + $0xc8] sm:$0xff] %v299
                %v301 = vld [vmem:[%s247 + $0x190] sm:$0xff]
                %302 = vst [vmem:[%s248 + $0xd0] sm:$0xff] %v301
                %v303 = vld [vmem:[%s247 + $0x198] sm:$0xff]
                %304 = vst [vmem:[%s248 + $0xd8] sm:$0xff] %v303
                %v305 = vld [vmem:[%s247 + $0x1a0] sm:$0xff]
                %306 = vst [vmem:[%s248 + $0xe0] sm:$0xff] %v305
                %v307 = vld [vmem:[%s247 + $0x1a8] sm:$0xff]
                %308 = vst [vmem:[%s248 + $0xe8] sm:$0xff] %v307
                %v309 = vld [vmem:[%s247 + $0x1b0] sm:$0xff]
                %310 = vst [vmem:[%s248 + $0xf0] sm:$0xff] %v309
                %v311 = vld [vmem:[%s247 + $0x1b8] sm:$0xff]
                %312 = vst [vmem:[%s248 + $0xf8] sm:$0xff] %v311
                %v313 = vld [vmem:[%s247 + $0x200] sm:$0xff]
                %314 = vst [vmem:[%s248 + $0x100] sm:$0xff] %v313
                %v315 = vld [vmem:[%s247 + $0x208] sm:$0xff]
                %316 = vst [vmem:[%s248 + $0x108] sm:$0xff] %v315
                %v317 = vld [vmem:[%s247 + $0x210] sm:$0xff]
                %318 = vst [vmem:[%s248 + $0x110] sm:$0xff] %v317
                %v319 = vld [vmem:[%s247 + $0x218] sm:$0xff]
                %320 = vst [vmem:[%s248 + $0x118] sm:$0xff] %v319
                %v321 = vld [vmem:[%s247 + $0x220] sm:$0xff]
                %322 = vst [vmem:[%s248 + $0x120] sm:$0xff] %v321
                %v323 = vld [vmem:[%s247 + $0x228] sm:$0xff]
                %324 = vst [vmem:[%s248 + $0x128] sm:$0xff] %v323
                %v325 = vld [vmem:[%s247 + $0x230] sm:$0xff]
                %326 = vst [vmem:[%s248 + $0x130] sm:$0xff] %v325
                %v327 = vld [vmem:[%s247 + $0x238] sm:$0xff]
                %328 = vst [vmem:[%s248 + $0x138] sm:$0xff] %v327
                %v329 = vld [vmem:[%s247 + $0x280] sm:$0xff]
                %330 = vst [vmem:[%s248 + $0x140] sm:$0xff] %v329
                %v331 = vld [vmem:[%s247 + $0x288] sm:$0xff]
                %332 = vst [vmem:[%s248 + $0x148] sm:$0xff] %v331
                %v333 = vld [vmem:[%s247 + $0x290] sm:$0xff]
                %334 = vst [vmem:[%s248 + $0x150] sm:$0xff] %v333
                %v335 = vld [vmem:[%s247 + $0x298] sm:$0xff]
                %336 = vst [vmem:[%s248 + $0x158] sm:$0xff] %v335
                %v337 = vld [vmem:[%s247 + $0x2a0] sm:$0xff]
                %338 = vst [vmem:[%s248 + $0x160] sm:$0xff] %v337
                %v339 = vld [vmem:[%s247 + $0x2a8] sm:$0xff]
                %340 = vst [vmem:[%s248 + $0x168] sm:$0xff] %v339
                %v341 = vld [vmem:[%s247 + $0x2b0] sm:$0xff]
                %342 = vst [vmem:[%s248 + $0x170] sm:$0xff] %v341
                %v343 = vld [vmem:[%s247 + $0x2b8] sm:$0xff]
                %344 = vst [vmem:[%s248 + $0x178] sm:$0xff] %v343
                %v345 = vld [vmem:[%s247 + $0x300] sm:$0xff]
                %346 = vst [vmem:[%s248 + $0x180] sm:$0xff] %v345
                %v347 = vld [vmem:[%s247 + $0x308] sm:$0xff]
                %348 = vst [vmem:[%s248 + $0x188] sm:$0xff] %v347
                %v349 = vld [vmem:[%s247 + $0x310] sm:$0xff]
                %350 = vst [vmem:[%s248 + $0x190] sm:$0xff] %v349
                %v351 = vld [vmem:[%s247 + $0x318] sm:$0xff]
                %352 = vst [vmem:[%s248 + $0x198] sm:$0xff] %v351
                %v353 = vld [vmem:[%s247 + $0x320] sm:$0xff]
                %354 = vst [vmem:[%s248 + $0x1a0] sm:$0xff] %v353
                %v355 = vld [vmem:[%s247 + $0x328] sm:$0xff]
                %356 = vst [vmem:[%s248 + $0x1a8] sm:$0xff] %v355
                %v357 = vld [vmem:[%s247 + $0x330] sm:$0xff]
                %358 = vst [vmem:[%s248 + $0x1b0] sm:$0xff] %v357
                %v359 = vld [vmem:[%s247 + $0x338] sm:$0xff]
                %360 = vst [vmem:[%s248 + $0x1b8] sm:$0xff] %v359
                %v361 = vld [vmem:[%s247 + $0x380] sm:$0xff]
                %362 = vst [vmem:[%s248 + $0x1c0] sm:$0xff] %v361
                %v363 = vld [vmem:[%s247 + $0x388] sm:$0xff]
                %364 = vst [vmem:[%s248 + $0x1c8] sm:$0xff] %v363
                %v365 = vld [vmem:[%s247 + $0x390] sm:$0xff]
                %366 = vst [vmem:[%s248 + $0x1d0] sm:$0xff] %v365
                %v367 = vld [vmem:[%s247 + $0x398] sm:$0xff]
                %368 = vst [vmem:[%s248 + $0x1d8] sm:$0xff] %v367
                %v369 = vld [vmem:[%s247 + $0x3a0] sm:$0xff]
                %370 = vst [vmem:[%s248 + $0x1e0] sm:$0xff] %v369
                %v371 = vld [vmem:[%s247 + $0x3a8] sm:$0xff]
                %372 = vst [vmem:[%s248 + $0x1e8] sm:$0xff] %v371
                %v373 = vld [vmem:[%s247 + $0x3b0] sm:$0xff]
                %374 = vst [vmem:[%s248 + $0x1f0] sm:$0xff] %v373
                %v375 = vld [vmem:[%s247 + $0x3b8] sm:$0xff]
                %376 = vst [vmem:[%s248 + $0x1f8] sm:$0xff] %v375
                %v377 = vld [vmem:[%s247 + $0x400] sm:$0xff]
                %378 = vst [vmem:[%s248 + $0x200] sm:$0xff] %v377
                %v379 = vld [vmem:[%s247 + $0x408] sm:$0xff]
                %380 = vst [vmem:[%s248 + $0x208] sm:$0xff] %v379
                %v381 = vld [vmem:[%s247 + $0x410] sm:$0xff]
                %382 = vst [vmem:[%s248 + $0x210] sm:$0xff] %v381
                %v383 = vld [vmem:[%s247 + $0x418] sm:$0xff]
                %384 = vst [vmem:[%s248 + $0x218] sm:$0xff] %v383
                %v385 = vld [vmem:[%s247 + $0x420] sm:$0xff]
                %386 = vst [vmem:[%s248 + $0x220] sm:$0xff] %v385
                %v387 = vld [vmem:[%s247 + $0x428] sm:$0xff]
                %388 = vst [vmem:[%s248 + $0x228] sm:$0xff] %v387
                %v389 = vld [vmem:[%s247 + $0x430] sm:$0xff]
                %390 = vst [vmem:[%s248 + $0x230] sm:$0xff] %v389
                %v391 = vld [vmem:[%s247 + $0x438] sm:$0xff]
                %392 = vst [vmem:[%s248 + $0x238] sm:$0xff] %v391
                %v393 = vld [vmem:[%s247 + $0x480] sm:$0xff]
                %394 = vst [vmem:[%s248 + $0x240] sm:$0xff] %v393
                %v395 = vld [vmem:[%s247 + $0x488] sm:$0xff]
                %396 = vst [vmem:[%s248 + $0x248] sm:$0xff] %v395
                %v397 = vld [vmem:[%s247 + $0x490] sm:$0xff]
                %398 = vst [vmem:[%s248 + $0x250] sm:$0xff] %v397
                %v399 = vld [vmem:[%s247 + $0x498] sm:$0xff]
                %400 = vst [vmem:[%s248 + $0x258] sm:$0xff] %v399
                %v401 = vld [vmem:[%s247 + $0x4a0] sm:$0xff]
                %402 = vst [vmem:[%s248 + $0x260] sm:$0xff] %v401
                %v403 = vld [vmem:[%s247 + $0x4a8] sm:$0xff]
                %404 = vst [vmem:[%s248 + $0x268] sm:$0xff] %v403
                %v405 = vld [vmem:[%s247 + $0x4b0] sm:$0xff]
                %406 = vst [vmem:[%s248 + $0x270] sm:$0xff] %v405
                %v407 = vld [vmem:[%s247 + $0x4b8] sm:$0xff]
                %408 = vst [vmem:[%s248 + $0x278] sm:$0xff] %v407
                %v409 = vld [vmem:[%s247 + $0x500] sm:$0xff]
                %410 = vst [vmem:[%s248 + $0x280] sm:$0xff] %v409
                %v411 = vld [vmem:[%s247 + $0x508] sm:$0xff]
                %412 = vst [vmem:[%s248 + $0x288] sm:$0xff] %v411
                %v413 = vld [vmem:[%s247 + $0x510] sm:$0xff]
                %414 = vst [vmem:[%s248 + $0x290] sm:$0xff] %v413
                %v415 = vld [vmem:[%s247 + $0x518] sm:$0xff]
                %416 = vst [vmem:[%s248 + $0x298] sm:$0xff] %v415
                %v417 = vld [vmem:[%s247 + $0x520] sm:$0xff]
                %418 = vst [vmem:[%s248 + $0x2a0] sm:$0xff] %v417
                %v419 = vld [vmem:[%s247 + $0x528] sm:$0xff]
                %420 = vst [vmem:[%s248 + $0x2a8] sm:$0xff] %v419
                %v421 = vld [vmem:[%s247 + $0x530] sm:$0xff]
                %422 = vst [vmem:[%s248 + $0x2b0] sm:$0xff] %v421
                %v423 = vld [vmem:[%s247 + $0x538] sm:$0xff]
                %424 = vst [vmem:[%s248 + $0x2b8] sm:$0xff] %v423
                %v425 = vld [vmem:[%s247 + $0x580] sm:$0xff]
                %426 = vst [vmem:[%s248 + $0x2c0] sm:$0xff] %v425
                %v427 = vld [vmem:[%s247 + $0x588] sm:$0xff]
                %428 = vst [vmem:[%s248 + $0x2c8] sm:$0xff] %v427
                %v429 = vld [vmem:[%s247 + $0x590] sm:$0xff]
                %430 = vst [vmem:[%s248 + $0x2d0] sm:$0xff] %v429
                %v431 = vld [vmem:[%s247 + $0x598] sm:$0xff]
                %432 = vst [vmem:[%s248 + $0x2d8] sm:$0xff] %v431
                %v433 = vld [vmem:[%s247 + $0x5a0] sm:$0xff]
                %434 = vst [vmem:[%s248 + $0x2e0] sm:$0xff] %v433
                %v435 = vld [vmem:[%s247 + $0x5a8] sm:$0xff]
                %436 = vst [vmem:[%s248 + $0x2e8] sm:$0xff] %v435
                %v437 = vld [vmem:[%s247 + $0x5b0] sm:$0xff]
                %438 = vst [vmem:[%s248 + $0x2f0] sm:$0xff] %v437
                %v439 = vld [vmem:[%s247 + $0x5b8] sm:$0xff]
                %440 = vst [vmem:[%s248 + $0x2f8] sm:$0xff] %v439
                %v441 = vld [vmem:[%s247 + $0x600] sm:$0xff]
                %442 = vst [vmem:[%s248 + $0x300] sm:$0xff] %v441
                %v443 = vld [vmem:[%s247 + $0x608] sm:$0xff]
                %444 = vst [vmem:[%s248 + $0x308] sm:$0xff] %v443
                %v445 = vld [vmem:[%s247 + $0x610] sm:$0xff]
                %446 = vst [vmem:[%s248 + $0x310] sm:$0xff] %v445
                %v447 = vld [vmem:[%s247 + $0x618] sm:$0xff]
                %448 = vst [vmem:[%s248 + $0x318] sm:$0xff] %v447
                %v449 = vld [vmem:[%s247 + $0x620] sm:$0xff]
                %450 = vst [vmem:[%s248 + $0x320] sm:$0xff] %v449
                %v451 = vld [vmem:[%s247 + $0x628] sm:$0xff]
                %452 = vst [vmem:[%s248 + $0x328] sm:$0xff] %v451
                %v453 = vld [vmem:[%s247 + $0x630] sm:$0xff]
                %454 = vst [vmem:[%s248 + $0x330] sm:$0xff] %v453
                %v455 = vld [vmem:[%s247 + $0x638] sm:$0xff]
                %456 = vst [vmem:[%s248 + $0x338] sm:$0xff] %v455
                %v457 = vld [vmem:[%s247 + $0x680] sm:$0xff]
                %458 = vst [vmem:[%s248 + $0x340] sm:$0xff] %v457
                %v459 = vld [vmem:[%s247 + $0x688] sm:$0xff]
                %460 = vst [vmem:[%s248 + $0x348] sm:$0xff] %v459
                %v461 = vld [vmem:[%s247 + $0x690] sm:$0xff]
                %462 = vst [vmem:[%s248 + $0x350] sm:$0xff] %v461
                %v463 = vld [vmem:[%s247 + $0x698] sm:$0xff]
                %464 = vst [vmem:[%s248 + $0x358] sm:$0xff] %v463
                %v465 = vld [vmem:[%s247 + $0x6a0] sm:$0xff]
                %466 = vst [vmem:[%s248 + $0x360] sm:$0xff] %v465
                %v467 = vld [vmem:[%s247 + $0x6a8] sm:$0xff]
                %468 = vst [vmem:[%s248 + $0x368] sm:$0xff] %v467
                %v469 = vld [vmem:[%s247 + $0x6b0] sm:$0xff]
                %470 = vst [vmem:[%s248 + $0x370] sm:$0xff] %v469
                %v471 = vld [vmem:[%s247 + $0x6b8] sm:$0xff]
                %472 = vst [vmem:[%s248 + $0x378] sm:$0xff] %v471
              $region45: #{conv3d_adn_forward.2} parent=39 // loop_footer
                %s246 = sadd.s32 1, %s242
              $region46: #{conv3d_adn_forward.2} parent=39 // loop_footer_branch
                %241 = sbr.rel target = $region42
              $region47: #{conv3d_adn_forward.2} parent=39 // loop_exit
                _
            $region40: #{conv3d_adn_forward.2} parent=35 // pred_fallthru
              _
            // Predicated region
            $region48: #{conv3d_adn_forward.2} parent=35 // pred_check
              _
            $region49: #{conv3d_adn_forward.2} parent=35 // pred_check_branch
              %474 = sbr.rel target = $region51
            $region50: #{conv3d_adn_forward.2} parent=35 // pred_region
              _
            $region51: #{conv3d_adn_forward.2} parent=35 // pred_fallthru
              _
          $region36: #{conv3d_adn_forward.2} parent=31 // pred_fallthru
            _
          %475 = vnop
        $region32: #{conv3d_adn_forward.2} parent=27 // pred_fallthru
          _
      $region28: #{conv3d_adn_forward.2} parent=5 // pred_fallthru
        _
      %p476 = scmp.le.s32.totalorder 1, %s14
      %p477 = scmp.lt.s32.totalorder %s14, 5
      %p478 = pnand %p476, %p477
      %p479 = pneg %p478
      // Predicated region
      $region52: #{conv3d_adn_forward.2} parent=5 // pred_check
        _
      $region53: #{conv3d_adn_forward.2} parent=5 // pred_check_branch
        %481 = sbr.rel (%p478) target = $region55
      $region54: #{conv3d_adn_forward.2} parent=5 // pred_region
        %s482 = ssub.s32 %s14, 1
        %s483 = sand.u32 %s41, 1
        %s484 = sand.u32 %s41, 1
        %s485 = smul.addr %s484, 896
        %s486 = scalar_lea.vmem [#allocation5], %s485
        // Predicated region
        $region56: #{conv3d_adn_forward.2} parent=54 // pred_check
          %p487 = pneg %p54
        $region57: #{conv3d_adn_forward.2} parent=54 // pred_check_branch
          %489 = sbr.rel (%p487) target = $region59
        $region58: #{conv3d_adn_forward.2} parent=54 // pred_region
          _
        $region59: #{conv3d_adn_forward.2} parent=54 // pred_fallthru
          _
        %s490 = sand.u32 %s41, 1
        %s491 = sand.u32 %s41, 1
        %s492 = smul.addr %s491, 896
        %s493 = scalar_lea.vmem [#allocation5], %s492
        %p494 = pneg %p54
        %p495 = pneg %p51
        %p496 = pneg %p75
        %p497 = pneg %p72
        %p498 = pneg %p96
        %p499 = pneg %p93
        %p500 = pneg %p117
        %p501 = pneg %p114
        %p502 = pneg %p145
        %p503 = pneg %p142
        %s504 = smul.u32 16, %s24
        %p505 = scmp.lt.s32.totalorder %s23, 1
        %s506 = scalar_select %p505, %s23, 1
        %p507 = scmp.lt.s32.totalorder %s504, 31
        %s508 = scalar_select %p507, %s504, 31
        %s509 = smul.addr %s506, 32
        %s510 = sadd.s32 %s508, %s509
        %s511 = smul.addr %s510, 8
        %s512 = scalar_lea.vmem %s4, %s511
        %p513 = pneg %p171
        %p514 = pneg %p168
        %p515 = scmp.lt.s32.totalorder %s23, 1
        %s516 = scalar_select %p515, %s23, 1
        %s517 = smul.addr %s516, 8
        %s518 = scalar_lea.vmem %s5, %s517
        %p519 = pneg %p197
        %p520 = pneg %p194
        %p521 = scmp.lt.s32.totalorder %s23, 1
        %s522 = scalar_select %p521, %s23, 1
        %s523 = smul.addr %s522, 8
        %s524 = scalar_lea.vmem %s6, %s523
        %s525 = smul.u32 16, %s24
        %s526 = smul.u32 16, %s24
        %p527 = scmp.lt.s32.totalorder %s23, 1
        %s528 = scalar_select %p527, %s23, 1
        %p529 = scmp.lt.s32.totalorder %s526, 31
        %s530 = scalar_select %p529, %s526, 31
        %s531 = smul.addr %s528, 32
        %s532 = sadd.s32 %s530, %s531
        %s533 = smul.addr %s532, 8
        %s534 = scalar_lea.vmem %s4, %s533
        %s535 = smul.u32 16, %s24
        %p536 = scmp.lt.s32.totalorder %s23, 1
        %s537 = scalar_select %p536, %s23, 1
        %s538 = smul.addr %s537, 8
        %s539 = scalar_lea.vmem %s5, %s538
        %p540 = scmp.lt.s32.totalorder %s23, 1
        %s541 = scalar_select %p540, %s23, 1
        %s542 = smul.addr %s541, 8
        %s543 = scalar_lea.vmem %s6, %s542
        %p545 = scmp.eq.s32.totalorder %s24, 0
        // Predicated region
        $region60: #{conv3d_adn_forward.2} parent=54 // pred_check
          %p546 = pneg %p545
        $region61: #{conv3d_adn_forward.2} parent=54 // pred_check_branch
          %548 = sbr.rel (%p546) target = $region63
        $region62: #{conv3d_adn_forward.2} parent=54 // pred_region
          %vm549 = vcmask 7168
          %550 = vst.msk [vmem:[#allocation2] sm:$0xff] %vm549, 0.0
          %551 = vst.msk [vmem:[#allocation3] sm:$0xff] %vm549, 0.0
        $region63: #{conv3d_adn_forward.2} parent=54 // pred_fallthru
          _
        %v552 = vld [vmem:[%s1] sm:$0xf]
        %v553 = vld [vmem:[%s486] sm:$0xff]
        %v554 = vld [vmem:[%s486 + $0x8] sm:$0xff]
        %v555 = vld [vmem:[%s486 + $0x10] sm:$0xff]
        %v556 = vld [vmem:[%s486 + $0x18] sm:$0xff]
        %v557 = vld [vmem:[%s486 + $0x20] sm:$0xff]
        %v558 = vld [vmem:[%s486 + $0x28] sm:$0xff]
        %v559 = vld [vmem:[%s486 + $0x30] sm:$0xff]
        %v560 = vld [vmem:[%s486 + $0x38] sm:$0xff]
        %v561 = vld [vmem:[%s486 + $0x40] sm:$0xff]
        %v562 = vld [vmem:[%s486 + $0x48] sm:$0xff]
        %v563 = vld [vmem:[%s486 + $0x50] sm:$0xff]
        %v564 = vld [vmem:[%s486 + $0x58] sm:$0xff]
        %v565 = vld [vmem:[%s486 + $0x60] sm:$0xff]
        %v566 = vld [vmem:[%s486 + $0x68] sm:$0xff]
        %v567 = vld [vmem:[%s486 + $0x70] sm:$0xff]
        %v568 = vld [vmem:[%s486 + $0x78] sm:$0xff]
        %v569 = vld [vmem:[%s486 + $0x80] sm:$0xff]
        %v570 = vld [vmem:[%s486 + $0x88] sm:$0xff]
        %v571 = vld [vmem:[%s486 + $0x90] sm:$0xff]
        %v572 = vld [vmem:[%s486 + $0x98] sm:$0xff]
        %v573 = vld [vmem:[%s486 + $0xa0] sm:$0xff]
        %v574 = vld [vmem:[%s486 + $0xa8] sm:$0xff]
        %v575 = vld [vmem:[%s486 + $0xb0] sm:$0xff]
        %v576 = vld [vmem:[%s486 + $0xb8] sm:$0xff]
        %v577 = vld [vmem:[%s486 + $0xc0] sm:$0xff]
        %v578 = vld [vmem:[%s486 + $0xc8] sm:$0xff]
        %v579 = vld [vmem:[%s486 + $0xd0] sm:$0xff]
        %v580 = vld [vmem:[%s486 + $0xd8] sm:$0xff]
        %v581 = vld [vmem:[%s486 + $0xe0] sm:$0xff]
        %v582 = vld [vmem:[%s486 + $0xe8] sm:$0xff]
        %v583 = vld [vmem:[%s486 + $0xf0] sm:$0xff]
        %v584 = vld [vmem:[%s486 + $0xf8] sm:$0xff]
        %v585 = vld [vmem:[%s486 + $0x100] sm:$0xff]
        %v586 = vld [vmem:[%s486 + $0x108] sm:$0xff]
        %v587 = vld [vmem:[%s486 + $0x110] sm:$0xff]
        %v588 = vld [vmem:[%s486 + $0x118] sm:$0xff]
        %v589 = vld [vmem:[%s486 + $0x120] sm:$0xff]
        %v590 = vld [vmem:[%s486 + $0x128] sm:$0xff]
        %v591 = vld [vmem:[%s486 + $0x130] sm:$0xff]
        %v592 = vld [vmem:[%s486 + $0x138] sm:$0xff]
        %v593 = vld [vmem:[%s486 + $0x140] sm:$0xff]
        %v594 = vld [vmem:[%s486 + $0x148] sm:$0xff]
        %v595 = vld [vmem:[%s486 + $0x150] sm:$0xff]
        %v596 = vld [vmem:[%s486 + $0x158] sm:$0xff]
        %v597 = vld [vmem:[%s486 + $0x160] sm:$0xff]
        %v598 = vld [vmem:[%s486 + $0x168] sm:$0xff]
        %v599 = vld [vmem:[%s486 + $0x170] sm:$0xff]
        %v600 = vld [vmem:[%s486 + $0x178] sm:$0xff]
        %v601 = vld [vmem:[%s486 + $0x180] sm:$0xff]
        %v602 = vld [vmem:[%s486 + $0x188] sm:$0xff]
        %v603 = vld [vmem:[%s486 + $0x190] sm:$0xff]
        %v604 = vld [vmem:[%s486 + $0x198] sm:$0xff]
        %v605 = vld [vmem:[%s486 + $0x1a0] sm:$0xff]
        %v606 = vld [vmem:[%s486 + $0x1a8] sm:$0xff]
        %v607 = vld [vmem:[%s486 + $0x1b0] sm:$0xff]
        %v608 = vld [vmem:[%s486 + $0x1b8] sm:$0xff]
        %v609 = vld [vmem:[%s486 + $0x1c0] sm:$0xff]
        %v610 = vld [vmem:[%s486 + $0x1c8] sm:$0xff]
        %v611 = vld [vmem:[%s486 + $0x1d0] sm:$0xff]
        %v612 = vld [vmem:[%s486 + $0x1d8] sm:$0xff]
        %v613 = vld [vmem:[%s486 + $0x1e0] sm:$0xff]
        %v614 = vld [vmem:[%s486 + $0x1e8] sm:$0xff]
        %v615 = vld [vmem:[%s486 + $0x1f0] sm:$0xff]
        %v616 = vld [vmem:[%s486 + $0x1f8] sm:$0xff]
        %v617 = vld [vmem:[%s486 + $0x200] sm:$0xff]
        %v618 = vld [vmem:[%s486 + $0x208] sm:$0xff]
        %v619 = vld [vmem:[%s486 + $0x210] sm:$0xff]
        %v620 = vld [vmem:[%s486 + $0x218] sm:$0xff]
        %v621 = vld [vmem:[%s486 + $0x220] sm:$0xff]
        %v622 = vld [vmem:[%s486 + $0x228] sm:$0xff]
        %v623 = vld [vmem:[%s486 + $0x230] sm:$0xff]
        %v624 = vld [vmem:[%s486 + $0x238] sm:$0xff]
        %v625 = vld [vmem:[%s486 + $0x240] sm:$0xff]
        %v626 = vld [vmem:[%s486 + $0x248] sm:$0xff]
        %v627 = vld [vmem:[%s486 + $0x250] sm:$0xff]
        %v628 = vld [vmem:[%s486 + $0x258] sm:$0xff]
        %v629 = vld [vmem:[%s486 + $0x260] sm:$0xff]
        %v630 = vld [vmem:[%s486 + $0x268] sm:$0xff]
        %v631 = vld [vmem:[%s486 + $0x270] sm:$0xff]
        %v632 = vld [vmem:[%s486 + $0x278] sm:$0xff]
        %v633 = vld [vmem:[%s486 + $0x280] sm:$0xff]
        %v634 = vld [vmem:[%s486 + $0x288] sm:$0xff]
        %v635 = vld [vmem:[%s486 + $0x290] sm:$0xff]
        %v636 = vld [vmem:[%s486 + $0x298] sm:$0xff]
        %v637 = vld [vmem:[%s486 + $0x2a0] sm:$0xff]
        %v638 = vld [vmem:[%s486 + $0x2a8] sm:$0xff]
        %v639 = vld [vmem:[%s486 + $0x2b0] sm:$0xff]
        %v640 = vld [vmem:[%s486 + $0x2b8] sm:$0xff]
        %v641 = vld [vmem:[%s486 + $0x2c0] sm:$0xff]
        %v642 = vld [vmem:[%s486 + $0x2c8] sm:$0xff]
        %v643 = vld [vmem:[%s486 + $0x2d0] sm:$0xff]
        %v644 = vld [vmem:[%s486 + $0x2d8] sm:$0xff]
        %v645 = vld [vmem:[%s486 + $0x2e0] sm:$0xff]
        %v646 = vld [vmem:[%s486 + $0x2e8] sm:$0xff]
        %v647 = vld [vmem:[%s486 + $0x2f0] sm:$0xff]
        %v648 = vld [vmem:[%s486 + $0x2f8] sm:$0xff]
        %v649 = vld [vmem:[%s486 + $0x300] sm:$0xff]
        %v650 = vld [vmem:[%s486 + $0x308] sm:$0xff]
        %v651 = vld [vmem:[%s486 + $0x310] sm:$0xff]
        %v652 = vld [vmem:[%s486 + $0x318] sm:$0xff]
        %v653 = vld [vmem:[%s486 + $0x320] sm:$0xff]
        %v654 = vld [vmem:[%s486 + $0x328] sm:$0xff]
        %v655 = vld [vmem:[%s486 + $0x330] sm:$0xff]
        %v656 = vld [vmem:[%s486 + $0x338] sm:$0xff]
        %v657 = vld [vmem:[%s486 + $0x340] sm:$0xff]
        %v658 = vld [vmem:[%s486 + $0x348] sm:$0xff]
        %v659 = vld [vmem:[%s486 + $0x350] sm:$0xff]
        %v660 = vld [vmem:[%s486 + $0x358] sm:$0xff]
        %v661 = vld [vmem:[%s486 + $0x360] sm:$0xff]
        %v662 = vld [vmem:[%s486 + $0x368] sm:$0xff]
        %v663 = vld [vmem:[%s486 + $0x370] sm:$0xff]
        %v664 = vld [vmem:[%s486 + $0x378] sm:$0xff]
        %v665 = vld [vmem:[%s2] sm:$0xff]
        %667 = vset.pattern.permute.xlu0 0
        %668 = vperm.xlu0 %667, %v665
        %v669 = vpop.permute.xlu0 %668
        %v783 = vunpack.c.l.b16 %v553
        %v784 = vunpack.c.h.b16 %v553
        %v785 = vunpack.c.l.b16 %v554
        %v786 = vunpack.c.h.b16 %v554
        %v787 = vunpack.c.l.b16 %v555
        %v788 = vunpack.c.h.b16 %v555
        %v789 = vunpack.c.l.b16 %v556
        %v790 = vunpack.c.h.b16 %v556
        %v791 = vunpack.c.l.b16 %v557
        %v792 = vunpack.c.h.b16 %v557
        %v793 = vunpack.c.l.b16 %v558
        %v794 = vunpack.c.h.b16 %v558
        %v795 = vunpack.c.l.b16 %v559
        %v796 = vunpack.c.h.b16 %v559
        %v797 = vunpack.c.l.b16 %v560
        %v798 = vunpack.c.h.b16 %v560
        %v799 = vunpack.c.l.b16 %v561
        %v800 = vunpack.c.h.b16 %v561
        %v801 = vunpack.c.l.b16 %v562
        %v802 = vunpack.c.h.b16 %v562
        %v803 = vunpack.c.l.b16 %v563
        %v804 = vunpack.c.h.b16 %v563
        %v805 = vunpack.c.l.b16 %v564
        %v806 = vunpack.c.h.b16 %v564
        %v807 = vunpack.c.l.b16 %v565
        %v808 = vunpack.c.h.b16 %v565
        %v809 = vunpack.c.l.b16 %v566
        %v810 = vunpack.c.h.b16 %v566
        %v811 = vunpack.c.l.b16 %v567
        %v812 = vunpack.c.h.b16 %v567
        %v813 = vunpack.c.l.b16 %v568
        %v814 = vunpack.c.h.b16 %v568
        %v815 = vunpack.c.l.b16 %v569
        %v816 = vunpack.c.h.b16 %v569
        %v817 = vunpack.c.l.b16 %v570
        %v818 = vunpack.c.h.b16 %v570
        %v819 = vunpack.c.l.b16 %v571
        %v820 = vunpack.c.h.b16 %v571
        %v821 = vunpack.c.l.b16 %v572
        %v822 = vunpack.c.h.b16 %v572
        %v823 = vunpack.c.l.b16 %v573
        %v824 = vunpack.c.h.b16 %v573
        %v825 = vunpack.c.l.b16 %v574
        %v826 = vunpack.c.h.b16 %v574
        %v827 = vunpack.c.l.b16 %v575
        %v828 = vunpack.c.h.b16 %v575
        %v829 = vunpack.c.l.b16 %v576
        %v830 = vunpack.c.h.b16 %v576
        %v831 = vunpack.c.l.b16 %v577
        %v832 = vunpack.c.h.b16 %v577
        %v833 = vunpack.c.l.b16 %v578
        %v834 = vunpack.c.h.b16 %v578
        %v835 = vunpack.c.l.b16 %v579
        %v836 = vunpack.c.h.b16 %v579
        %v837 = vunpack.c.l.b16 %v580
        %v838 = vunpack.c.h.b16 %v580
        %v839 = vunpack.c.l.b16 %v581
        %v840 = vunpack.c.h.b16 %v581
        %v841 = vunpack.c.l.b16 %v582
        %v842 = vunpack.c.h.b16 %v582
        %v843 = vunpack.c.l.b16 %v583
        %v844 = vunpack.c.h.b16 %v583
        %v845 = vunpack.c.l.b16 %v584
        %v846 = vunpack.c.h.b16 %v584
        %v847 = vunpack.c.l.b16 %v585
        %v848 = vunpack.c.h.b16 %v585
        %v849 = vunpack.c.l.b16 %v586
        %v850 = vunpack.c.h.b16 %v586
        %v851 = vunpack.c.l.b16 %v587
        %v852 = vunpack.c.h.b16 %v587
        %v853 = vunpack.c.l.b16 %v588
        %v854 = vunpack.c.h.b16 %v588
        %v855 = vunpack.c.l.b16 %v589
        %v856 = vunpack.c.h.b16 %v589
        %v857 = vunpack.c.l.b16 %v590
        %v858 = vunpack.c.h.b16 %v590
        %v859 = vunpack.c.l.b16 %v591
        %v860 = vunpack.c.h.b16 %v591
        %v861 = vunpack.c.l.b16 %v592
        %v862 = vunpack.c.h.b16 %v592
        %v863 = vunpack.c.l.b16 %v593
        %v864 = vunpack.c.h.b16 %v593
        %v865 = vunpack.c.l.b16 %v594
        %v866 = vunpack.c.h.b16 %v594
        %v867 = vunpack.c.l.b16 %v595
        %v868 = vunpack.c.h.b16 %v595
        %v869 = vunpack.c.l.b16 %v596
        %v870 = vunpack.c.h.b16 %v596
        %v871 = vunpack.c.l.b16 %v597
        %v872 = vunpack.c.h.b16 %v597
        %v873 = vunpack.c.l.b16 %v598
        %v874 = vunpack.c.h.b16 %v598
        %v875 = vunpack.c.l.b16 %v599
        %v876 = vunpack.c.h.b16 %v599
        %v877 = vunpack.c.l.b16 %v600
        %v878 = vunpack.c.h.b16 %v600
        %v879 = vunpack.c.l.b16 %v601
        %v880 = vunpack.c.h.b16 %v601
        %v881 = vunpack.c.l.b16 %v602
        %v882 = vunpack.c.h.b16 %v602
        %v883 = vunpack.c.l.b16 %v603
        %v884 = vunpack.c.h.b16 %v603
        %v885 = vunpack.c.l.b16 %v604
        %v886 = vunpack.c.h.b16 %v604
        %v887 = vunpack.c.l.b16 %v605
        %v888 = vunpack.c.h.b16 %v605
        %v889 = vunpack.c.l.b16 %v606
        %v890 = vunpack.c.h.b16 %v606
        %v891 = vunpack.c.l.b16 %v607
        %v892 = vunpack.c.h.b16 %v607
        %v893 = vunpack.c.l.b16 %v608
        %v894 = vunpack.c.h.b16 %v608
        %v895 = vunpack.c.l.b16 %v609
        %v896 = vunpack.c.h.b16 %v609
        %v897 = vunpack.c.l.b16 %v610
        %v898 = vunpack.c.h.b16 %v610
        %v899 = vunpack.c.l.b16 %v611
        %v900 = vunpack.c.h.b16 %v611
        %v901 = vunpack.c.l.b16 %v612
        %v902 = vunpack.c.h.b16 %v612
        %v903 = vunpack.c.l.b16 %v613
        %v904 = vunpack.c.h.b16 %v613
        %v905 = vunpack.c.l.b16 %v614
        %v906 = vunpack.c.h.b16 %v614
        %v907 = vunpack.c.l.b16 %v615
        %v908 = vunpack.c.h.b16 %v615
        %v909 = vunpack.c.l.b16 %v616
        %v910 = vunpack.c.h.b16 %v616
        %v911 = vunpack.c.l.b16 %v617
        %v912 = vunpack.c.h.b16 %v617
        %v913 = vunpack.c.l.b16 %v618
        %v914 = vunpack.c.h.b16 %v618
        %v915 = vunpack.c.l.b16 %v619
        %v916 = vunpack.c.h.b16 %v619
        %v917 = vunpack.c.l.b16 %v620
        %v918 = vunpack.c.h.b16 %v620
        %v919 = vunpack.c.l.b16 %v621
        %v920 = vunpack.c.h.b16 %v621
        %v921 = vunpack.c.l.b16 %v622
        %v922 = vunpack.c.h.b16 %v622
        %v923 = vunpack.c.l.b16 %v623
        %v924 = vunpack.c.h.b16 %v623
        %v925 = vunpack.c.l.b16 %v624
        %v926 = vunpack.c.h.b16 %v624
        %v927 = vunpack.c.l.b16 %v625
        %v928 = vunpack.c.h.b16 %v625
        %v929 = vunpack.c.l.b16 %v626
        %v930 = vunpack.c.h.b16 %v626
        %v931 = vunpack.c.l.b16 %v627
        %v932 = vunpack.c.h.b16 %v627
        %v933 = vunpack.c.l.b16 %v628
        %v934 = vunpack.c.h.b16 %v628
        %v935 = vunpack.c.l.b16 %v629
        %v936 = vunpack.c.h.b16 %v629
        %v937 = vunpack.c.l.b16 %v630
        %v938 = vunpack.c.h.b16 %v630
        %v939 = vunpack.c.l.b16 %v631
        %v940 = vunpack.c.h.b16 %v631
        %v941 = vunpack.c.l.b16 %v632
        %v942 = vunpack.c.h.b16 %v632
        %v943 = vunpack.c.l.b16 %v633
        %v944 = vunpack.c.h.b16 %v633
        %v945 = vunpack.c.l.b16 %v634
        %v946 = vunpack.c.h.b16 %v634
        %v947 = vunpack.c.l.b16 %v635
        %v948 = vunpack.c.h.b16 %v635
        %v949 = vunpack.c.l.b16 %v636
        %v950 = vunpack.c.h.b16 %v636
        %v951 = vunpack.c.l.b16 %v637
        %v952 = vunpack.c.h.b16 %v637
        %v953 = vunpack.c.l.b16 %v638
        %v954 = vunpack.c.h.b16 %v638
        %v955 = vunpack.c.l.b16 %v639
        %v956 = vunpack.c.h.b16 %v639
        %v957 = vunpack.c.l.b16 %v640
        %v958 = vunpack.c.h.b16 %v640
        %v959 = vunpack.c.l.b16 %v641
        %v960 = vunpack.c.h.b16 %v641
        %v961 = vunpack.c.l.b16 %v642
        %v962 = vunpack.c.h.b16 %v642
        %v963 = vunpack.c.l.b16 %v643
        %v964 = vunpack.c.h.b16 %v643
        %v965 = vunpack.c.l.b16 %v644
        %v966 = vunpack.c.h.b16 %v644
        %v967 = vunpack.c.l.b16 %v645
        %v968 = vunpack.c.h.b16 %v645
        %v969 = vunpack.c.l.b16 %v646
        %v970 = vunpack.c.h.b16 %v646
        %v971 = vunpack.c.l.b16 %v647
        %v972 = vunpack.c.h.b16 %v647
        %v973 = vunpack.c.l.b16 %v648
        %v974 = vunpack.c.h.b16 %v648
        %v975 = vunpack.c.l.b16 %v649
        %v976 = vunpack.c.h.b16 %v649
        %v977 = vunpack.c.l.b16 %v650
        %v978 = vunpack.c.h.b16 %v650
        %v979 = vunpack.c.l.b16 %v651
        %v980 = vunpack.c.h.b16 %v651
        %v981 = vunpack.c.l.b16 %v652
        %v982 = vunpack.c.h.b16 %v652
        %v983 = vunpack.c.l.b16 %v653
        %v984 = vunpack.c.h.b16 %v653
        %v985 = vunpack.c.l.b16 %v654
        %v986 = vunpack.c.h.b16 %v654
        %v987 = vunpack.c.l.b16 %v655
        %v988 = vunpack.c.h.b16 %v655
        %v989 = vunpack.c.l.b16 %v656
        %v990 = vunpack.c.h.b16 %v656
        %v991 = vunpack.c.l.b16 %v657
        %v992 = vunpack.c.h.b16 %v657
        %v993 = vunpack.c.l.b16 %v658
        %v994 = vunpack.c.h.b16 %v658
        %v995 = vunpack.c.l.b16 %v659
        %v996 = vunpack.c.h.b16 %v659
        %v997 = vunpack.c.l.b16 %v660
        %v998 = vunpack.c.h.b16 %v660
        %v999 = vunpack.c.l.b16 %v661
        %v1000 = vunpack.c.h.b16 %v661
        %v1001 = vunpack.c.l.b16 %v662
        %v1002 = vunpack.c.h.b16 %v662
        %v1003 = vunpack.c.l.b16 %v663
        %v1004 = vunpack.c.h.b16 %v663
        %v1005 = vunpack.c.l.b16 %v664
        %v1006 = vunpack.c.h.b16 %v664
        %v1007 = vpack.c.b16 %v799, %v783
        %v1008 = vpack.c.b16 %v800, %v784
        %v1009 = vpack.c.b16 %v801, %v785
        %v1010 = vpack.c.b16 %v802, %v786
        %v1011 = vpack.c.b16 %v803, %v787
        %v1012 = vpack.c.b16 %v804, %v788
        %v1013 = vpack.c.b16 %v805, %v789
        %v1014 = vpack.c.b16 %v806, %v790
        %v1015 = vpack.c.b16 %v807, %v791
        %v1016 = vpack.c.b16 %v808, %v792
        %v1017 = vpack.c.b16 %v809, %v793
        %v1018 = vpack.c.b16 %v810, %v794
        %v1019 = vpack.c.b16 %v811, %v795
        %v1020 = vpack.c.b16 %v812, %v796
        %v1021 = vpack.c.b16 %v813, %v797
        %v1022 = vpack.c.b16 %v814, %v798
        %v1023 = vpack.c.b16 %v831, %v815
        %v1024 = vpack.c.b16 %v832, %v816
        %v1025 = vpack.c.b16 %v833, %v817
        %v1026 = vpack.c.b16 %v834, %v818
        %v1027 = vpack.c.b16 %v835, %v819
        %v1028 = vpack.c.b16 %v836, %v820
        %v1029 = vpack.c.b16 %v837, %v821
        %v1030 = vpack.c.b16 %v838, %v822
        %v1031 = vpack.c.b16 %v839, %v823
        %v1032 = vpack.c.b16 %v840, %v824
        %v1033 = vpack.c.b16 %v841, %v825
        %v1034 = vpack.c.b16 %v842, %v826
        %v1035 = vpack.c.b16 %v843, %v827
        %v1036 = vpack.c.b16 %v844, %v828
        %v1037 = vpack.c.b16 %v845, %v829
        %v1038 = vpack.c.b16 %v846, %v830
        %v1039 = vpack.c.b16 %v863, %v847
        %v1040 = vpack.c.b16 %v864, %v848
        %v1041 = vpack.c.b16 %v865, %v849
        %v1042 = vpack.c.b16 %v866, %v850
        %v1043 = vpack.c.b16 %v867, %v851
        %v1044 = vpack.c.b16 %v868, %v852
        %v1045 = vpack.c.b16 %v869, %v853
        %v1046 = vpack.c.b16 %v870, %v854
        %v1047 = vpack.c.b16 %v871, %v855
        %v1048 = vpack.c.b16 %v872, %v856
        %v1049 = vpack.c.b16 %v873, %v857
        %v1050 = vpack.c.b16 %v874, %v858
        %v1051 = vpack.c.b16 %v875, %v859
        %v1052 = vpack.c.b16 %v876, %v860
        %v1053 = vpack.c.b16 %v877, %v861
        %v1054 = vpack.c.b16 %v878, %v862
        %v1055 = vpack.c.b16 %v895, %v879
        %v1056 = vpack.c.b16 %v896, %v880
        %v1057 = vpack.c.b16 %v897, %v881
        %v1058 = vpack.c.b16 %v898, %v882
        %v1059 = vpack.c.b16 %v899, %v883
        %v1060 = vpack.c.b16 %v900, %v884
        %v1061 = vpack.c.b16 %v901, %v885
        %v1062 = vpack.c.b16 %v902, %v886
        %v1063 = vpack.c.b16 %v903, %v887
        %v1064 = vpack.c.b16 %v904, %v888
        %v1065 = vpack.c.b16 %v905, %v889
        %v1066 = vpack.c.b16 %v906, %v890
        %v1067 = vpack.c.b16 %v907, %v891
        %v1068 = vpack.c.b16 %v908, %v892
        %v1069 = vpack.c.b16 %v909, %v893
        %v1070 = vpack.c.b16 %v910, %v894
        %v1071 = vpack.c.b16 %v927, %v911
        %v1072 = vpack.c.b16 %v928, %v912
        %v1073 = vpack.c.b16 %v929, %v913
        %v1074 = vpack.c.b16 %v930, %v914
        %v1075 = vpack.c.b16 %v931, %v915
        %v1076 = vpack.c.b16 %v932, %v916
        %v1077 = vpack.c.b16 %v933, %v917
        %v1078 = vpack.c.b16 %v934, %v918
        %v1079 = vpack.c.b16 %v935, %v919
        %v1080 = vpack.c.b16 %v936, %v920
        %v1081 = vpack.c.b16 %v937, %v921
        %v1082 = vpack.c.b16 %v938, %v922
        %v1083 = vpack.c.b16 %v939, %v923
        %v1084 = vpack.c.b16 %v940, %v924
        %v1085 = vpack.c.b16 %v941, %v925
        %v1086 = vpack.c.b16 %v942, %v926
        %v1087 = vpack.c.b16 %v959, %v943
        %v1088 = vpack.c.b16 %v960, %v944
        %v1089 = vpack.c.b16 %v961, %v945
        %v1090 = vpack.c.b16 %v962, %v946
        %v1091 = vpack.c.b16 %v963, %v947
        %v1092 = vpack.c.b16 %v964, %v948
        %v1093 = vpack.c.b16 %v965, %v949
        %v1094 = vpack.c.b16 %v966, %v950
        %v1095 = vpack.c.b16 %v967, %v951
        %v1096 = vpack.c.b16 %v968, %v952
        %v1097 = vpack.c.b16 %v969, %v953
        %v1098 = vpack.c.b16 %v970, %v954
        %v1099 = vpack.c.b16 %v971, %v955
        %v1100 = vpack.c.b16 %v972, %v956
        %v1101 = vpack.c.b16 %v973, %v957
        %v1102 = vpack.c.b16 %v974, %v958
        %v1103 = vpack.c.b16 %v991, %v975
        %v1104 = vpack.c.b16 %v992, %v976
        %v1105 = vpack.c.b16 %v993, %v977
        %v1106 = vpack.c.b16 %v994, %v978
        %v1107 = vpack.c.b16 %v995, %v979
        %v1108 = vpack.c.b16 %v996, %v980
        %v1109 = vpack.c.b16 %v997, %v981
        %v1110 = vpack.c.b16 %v998, %v982
        %v1111 = vpack.c.b16 %v999, %v983
        %v1112 = vpack.c.b16 %v1000, %v984
        %v1113 = vpack.c.b16 %v1001, %v985
        %v1114 = vpack.c.b16 %v1002, %v986
        %v1115 = vpack.c.b16 %v1003, %v987
        %v1116 = vpack.c.b16 %v1004, %v988
        %v1117 = vpack.c.b16 %v1005, %v989
        %v1118 = vpack.c.b16 %v1006, %v990
        %vm1231 = vcmask 916480
        %v1233 = vsel %vm1231, %v552, 0
        %1235 = vmatprep.subr.bf16.mxu0 %v1008
        %1236 = vmatpush1.bf16.msra.mxu0 %v1007
        %1237 = vmatprep.subr.bf16.mxu0 %v1024
        %1238 = vmatpush1.bf16.msra.mxu0 %v1023
        %1239 = vmatprep.subr.bf16.mxu0 %v1040
        %1240 = vmatpush1.bf16.msra.mxu0 %v1039
        %1241 = vmatprep.subr.bf16.mxu0 %v1056
        %1242 = vmatpush1.bf16.msra.mxu0 %v1055
        %1243 = vmatprep.subr.bf16.mxu0 %v1072
        %1244 = vmatpush1.bf16.msra.mxu0 %v1071
        %1245 = vmatprep.subr.bf16.mxu0 %v1088
        %1246 = vmatpush1.bf16.msra.mxu0 %v1087
        %1247 = vmatprep.subr.bf16.mxu0 %v1104
        %1248 = vmatpush1.bf16.msra.mxu0 %v1103
        %1249 = vmatprep.subr.bf16.mxu0 0
        %1250 = vmatpush1.bf16.msra.mxu0 0
        %1251 = vmatprep.subr.bf16.mxu0 0
        %1252 = vmatpush1.bf16.msra.mxu0 0
        %1253 = vmatprep.subr.bf16.mxu0 0
        %1254 = vmatpush1.bf16.msra.mxu0 0
        %1255 = vmatprep.subr.bf16.mxu0 0
        %1256 = vmatpush1.bf16.msra.mxu0 0
        %1257 = vmatprep.subr.bf16.mxu0 0
        %1258 = vmatpush1.bf16.msra.mxu0 0
        %1259 = vmatprep.subr.bf16.mxu0 0
        %1260 = vmatpush1.bf16.msra.mxu0 0
        %1261 = vmatprep.subr.bf16.mxu0 0
        %1262 = vmatpush1.bf16.msra.mxu0 0
        %1263 = vmatprep.subr.bf16.mxu0 0
        %1264 = vmatpush1.bf16.msra.mxu0 0
        %1265 = vmatprep.subr.bf16.mxu0 0
        %1266 = vmatpush1.bf16.msra.mxu0 0
        %1267 = vmatprep.mubr.bf16.mxu0 0
        %1268 = vmatmul.mubr.bf16.gmra.mrb[0].mxu0 %v1233
        %v1269 = vpop.f32.mrb[0].mxu0
        %v1270 = vadd.f32 %v669, %v1269
        %v1271 = vpop.f32.mrb[0].mxu0
        %v1272 = vadd.f32 %v669, %v1271
        %v1273 = vpop.f32.mrb[0].mxu0
        %v1274 = vpop.f32.mrb[0].mxu0
        %1275 = vdwg.mxu0
        %1276 = vmatprep.subr.bf16.mxu0 %v1010
        %1277 = vmatpush1.bf16.msra.mxu0 %v1009
        %1278 = vmatprep.subr.bf16.mxu0 %v1026
        %1279 = vmatpush1.bf16.msra.mxu0 %v1025
        %1280 = vmatprep.subr.bf16.mxu0 %v1042
        %1281 = vmatpush1.bf16.msra.mxu0 %v1041
        %1282 = vmatprep.subr.bf16.mxu0 %v1058
        %1283 = vmatpush1.bf16.msra.mxu0 %v1057
        %1284 = vmatprep.subr.bf16.mxu0 %v1074
        %1285 = vmatpush1.bf16.msra.mxu0 %v1073
        %1286 = vmatprep.subr.bf16.mxu0 %v1090
        %1287 = vmatpush1.bf16.msra.mxu0 %v1089
        %1288 = vmatprep.subr.bf16.mxu0 %v1106
        %1289 = vmatpush1.bf16.msra.mxu0 %v1105
        %1290 = vmatprep.subr.bf16.mxu0 0
        %1291 = vmatpush1.bf16.msra.mxu0 0
        %1292 = vmatprep.subr.bf16.mxu0 0
        %1293 = vmatpush1.bf16.msra.mxu0 0
        %1294 = vmatprep.subr.bf16.mxu0 0
        %1295 = vmatpush1.bf16.msra.mxu0 0
        %1296 = vmatprep.subr.bf16.mxu0 0
        %1297 = vmatpush1.bf16.msra.mxu0 0
        %1298 = vmatprep.subr.bf16.mxu0 0
        %1299 = vmatpush1.bf16.msra.mxu0 0
        %1300 = vmatprep.subr.bf16.mxu0 0
        %1301 = vmatpush1.bf16.msra.mxu0 0
        %1302 = vmatprep.subr.bf16.mxu0 0
        %1303 = vmatpush1.bf16.msra.mxu0 0
        %1304 = vmatprep.subr.bf16.mxu0 0
        %1305 = vmatpush1.bf16.msra.mxu0 0
        %1306 = vmatprep.subr.bf16.mxu0 0
        %1307 = vmatpush1.bf16.msra.mxu0 0
        %1308 = vmatprep.mubr.bf16.mxu0 0
        %1309 = vmatmul.mubr.bf16.gmra.mrb[0].mxu0 %v1233
        %v1310 = vpop.f32.mrb[0].mxu0
        %v1311 = vadd.f32 %v669, %v1310
        %v1312 = vpop.f32.mrb[0].mxu0
        %v1313 = vadd.f32 %v669, %v1312
        %v1314 = vpop.f32.mrb[0].mxu0
        %v1315 = vpop.f32.mrb[0].mxu0
        %1316 = vdwg.mxu0
        %1317 = vmatprep.subr.bf16.mxu0 %v1012
        %1318 = vmatpush1.bf16.msra.mxu0 %v1011
        %1319 = vmatprep.subr.bf16.mxu0 %v1028
        %1320 = vmatpush1.bf16.msra.mxu0 %v1027
        %1321 = vmatprep.subr.bf16.mxu0 %v1044
        %1322 = vmatpush1.bf16.msra.mxu0 %v1043
        %1323 = vmatprep.subr.bf16.mxu0 %v1060
        %1324 = vmatpush1.bf16.msra.mxu0 %v1059
        %1325 = vmatprep.subr.bf16.mxu0 %v1076
        %1326 = vmatpush1.bf16.msra.mxu0 %v1075
        %1327 = vmatprep.subr.bf16.mxu0 %v1092
        %1328 = vmatpush1.bf16.msra.mxu0 %v1091
        %1329 = vmatprep.subr.bf16.mxu0 %v1108
        %1330 = vmatpush1.bf16.msra.mxu0 %v1107
        %1331 = vmatprep.subr.bf16.mxu0 0
        %1332 = vmatpush1.bf16.msra.mxu0 0
        %1333 = vmatprep.subr.bf16.mxu0 0
        %1334 = vmatpush1.bf16.msra.mxu0 0
        %1335 = vmatprep.subr.bf16.mxu0 0
        %1336 = vmatpush1.bf16.msra.mxu0 0
        %1337 = vmatprep.subr.bf16.mxu0 0
        %1338 = vmatpush1.bf16.msra.mxu0 0
        %1339 = vmatprep.subr.bf16.mxu0 0
        %1340 = vmatpush1.bf16.msra.mxu0 0
        %1341 = vmatprep.subr.bf16.mxu0 0
        %1342 = vmatpush1.bf16.msra.mxu0 0
        %1343 = vmatprep.subr.bf16.mxu0 0
        %1344 = vmatpush1.bf16.msra.mxu0 0
        %1345 = vmatprep.subr.bf16.mxu0 0
        %1346 = vmatpush1.bf16.msra.mxu0 0
        %1347 = vmatprep.subr.bf16.mxu0 0
        %1348 = vmatpush1.bf16.msra.mxu0 0
        %1349 = vmatprep.mubr.bf16.mxu0 0
        %1350 = vmatmul.mubr.bf16.gmra.mrb[0].mxu0 %v1233
        %v1351 = vpop.f32.mrb[0].mxu0
        %v1352 = vadd.f32 %v669, %v1351
        %v1353 = vpop.f32.mrb[0].mxu0
        %v1354 = vadd.f32 %v669, %v1353
        %v1355 = vpop.f32.mrb[0].mxu0
        %v1356 = vpop.f32.mrb[0].mxu0
        %1357 = vdwg.mxu0
        %1358 = vmatprep.subr.bf16.mxu0 %v1014
        %1359 = vmatpush1.bf16.msra.mxu0 %v1013
        %1360 = vmatprep.subr.bf16.mxu0 %v1030
        %1361 = vmatpush1.bf16.msra.mxu0 %v1029
        %1362 = vmatprep.subr.bf16.mxu0 %v1046
        %1363 = vmatpush1.bf16.msra.mxu0 %v1045
        %1364 = vmatprep.subr.bf16.mxu0 %v1062
        %1365 = vmatpush1.bf16.msra.mxu0 %v1061
        %1366 = vmatprep.subr.bf16.mxu0 %v1078
        %1367 = vmatpush1.bf16.msra.mxu0 %v1077
        %1368 = vmatprep.subr.bf16.mxu0 %v1094
        %1369 = vmatpush1.bf16.msra.mxu0 %v1093
        %1370 = vmatprep.subr.bf16.mxu0 %v1110
        %1371 = vmatpush1.bf16.msra.mxu0 %v1109
        %1372 = vmatprep.subr.bf16.mxu0 0
        %1373 = vmatpush1.bf16.msra.mxu0 0
        %1374 = vmatprep.subr.bf16.mxu0 0
        %1375 = vmatpush1.bf16.msra.mxu0 0
        %1376 = vmatprep.subr.bf16.mxu0 0
        %1377 = vmatpush1.bf16.msra.mxu0 0
        %1378 = vmatprep.subr.bf16.mxu0 0
        %1379 = vmatpush1.bf16.msra.mxu0 0
        %1380 = vmatprep.subr.bf16.mxu0 0
        %1381 = vmatpush1.bf16.msra.mxu0 0
        %1382 = vmatprep.subr.bf16.mxu0 0
        %1383 = vmatpush1.bf16.msra.mxu0 0
        %1384 = vmatprep.subr.bf16.mxu0 0
        %1385 = vmatpush1.bf16.msra.mxu0 0
        %1386 = vmatprep.subr.bf16.mxu0 0
        %1387 = vmatpush1.bf16.msra.mxu0 0
        %1388 = vmatprep.subr.bf16.mxu0 0
        %1389 = vmatpush1.bf16.msra.mxu0 0
        %1390 = vmatprep.mubr.bf16.mxu0 0
        %1391 = vmatmul.mubr.bf16.gmra.mrb[0].mxu0 %v1233
        %v1392 = vpop.f32.mrb[0].mxu0
        %v1393 = vadd.f32 %v669, %v1392
        %v1394 = vpop.f32.mrb[0].mxu0
        %v1395 = vadd.f32 %v669, %v1394
        %v1396 = vpop.f32.mrb[0].mxu0
        %v1397 = vpop.f32.mrb[0].mxu0
        %1398 = vdwg.mxu0
        %1399 = vmatprep.subr.bf16.mxu0 %v1016
        %1400 = vmatpush1.bf16.msra.mxu0 %v1015
        %1401 = vmatprep.subr.bf16.mxu0 %v1032
        %1402 = vmatpush1.bf16.msra.mxu0 %v1031
        %1403 = vmatprep.subr.bf16.mxu0 %v1048
        %1404 = vmatpush1.bf16.msra.mxu0 %v1047
        %1405 = vmatprep.subr.bf16.mxu0 %v1064
        %1406 = vmatpush1.bf16.msra.mxu0 %v1063
        %1407 = vmatprep.subr.bf16.mxu0 %v1080
        %1408 = vmatpush1.bf16.msra.mxu0 %v1079
        %1409 = vmatprep.subr.bf16.mxu0 %v1096
        %1410 = vmatpush1.bf16.msra.mxu0 %v1095
        %1411 = vmatprep.subr.bf16.mxu0 %v1112
        %1412 = vmatpush1.bf16.msra.mxu0 %v1111
        %1413 = vmatprep.subr.bf16.mxu0 0
        %1414 = vmatpush1.bf16.msra.mxu0 0
        %1415 = vmatprep.subr.bf16.mxu0 0
        %1416 = vmatpush1.bf16.msra.mxu0 0
        %1417 = vmatprep.subr.bf16.mxu0 0
        %1418 = vmatpush1.bf16.msra.mxu0 0
        %1419 = vmatprep.subr.bf16.mxu0 0
        %1420 = vmatpush1.bf16.msra.mxu0 0
        %1421 = vmatprep.subr.bf16.mxu0 0
        %1422 = vmatpush1.bf16.msra.mxu0 0
        %1423 = vmatprep.subr.bf16.mxu0 0
        %1424 = vmatpush1.bf16.msra.mxu0 0
        %1425 = vmatprep.subr.bf16.mxu0 0
        %1426 = vmatpush1.bf16.msra.mxu0 0
        %1427 = vmatprep.subr.bf16.mxu0 0
        %1428 = vmatpush1.bf16.msra.mxu0 0
        %1429 = vmatprep.subr.bf16.mxu0 0
        %1430 = vmatpush1.bf16.msra.mxu0 0
        %1431 = vmatprep.mubr.bf16.mxu0 0
        %1432 = vmatmul.mubr.bf16.gmra.mrb[0].mxu0 %v1233
        %v1433 = vpop.f32.mrb[0].mxu0
        %v1434 = vadd.f32 %v669, %v1433
        %v1435 = vpop.f32.mrb[0].mxu0
        %v1436 = vadd.f32 %v669, %v1435
        %v1437 = vpop.f32.mrb[0].mxu0
        %v1438 = vpop.f32.mrb[0].mxu0
        %1439 = vdwg.mxu0
        %1440 = vmatprep.subr.bf16.mxu0 %v1018
        %1441 = vmatpush1.bf16.msra.mxu0 %v1017
        %1442 = vmatprep.subr.bf16.mxu0 %v1034
        %1443 = vmatpush1.bf16.msra.mxu0 %v1033
        %1444 = vmatprep.subr.bf16.mxu0 %v1050
        %1445 = vmatpush1.bf16.msra.mxu0 %v1049
        %1446 = vmatprep.subr.bf16.mxu0 %v1066
        %1447 = vmatpush1.bf16.msra.mxu0 %v1065
        %1448 = vmatprep.subr.bf16.mxu0 %v1082
        %1449 = vmatpush1.bf16.msra.mxu0 %v1081
        %1450 = vmatprep.subr.bf16.mxu0 %v1098
        %1451 = vmatpush1.bf16.msra.mxu0 %v1097
        %1452 = vmatprep.subr.bf16.mxu0 %v1114
        %1453 = vmatpush1.bf16.msra.mxu0 %v1113
        %1454 = vmatprep.subr.bf16.mxu0 0
        %1455 = vmatpush1.bf16.msra.mxu0 0
        %1456 = vmatprep.subr.bf16.mxu0 0
        %1457 = vmatpush1.bf16.msra.mxu0 0
        %1458 = vmatprep.subr.bf16.mxu0 0
        %1459 = vmatpush1.bf16.msra.mxu0 0
        %1460 = vmatprep.subr.bf16.mxu0 0
        %1461 = vmatpush1.bf16.msra.mxu0 0
        %1462 = vmatprep.subr.bf16.mxu0 0
        %1463 = vmatpush1.bf16.msra.mxu0 0
        %1464 = vmatprep.subr.bf16.mxu0 0
        %1465 = vmatpush1.bf16.msra.mxu0 0
        %1466 = vmatprep.subr.bf16.mxu0 0
        %1467 = vmatpush1.bf16.msra.mxu0 0
        %1468 = vmatprep.subr.bf16.mxu0 0
        %1469 = vmatpush1.bf16.msra.mxu0 0
        %1470 = vmatprep.subr.bf16.mxu0 0
        %1471 = vmatpush1.bf16.msra.mxu0 0
        %1472 = vmatprep.mubr.bf16.mxu0 0
        %1473 = vmatmul.mubr.bf16.gmra.mrb[0].mxu0 %v1233
        %v1474 = vpop.f32.mrb[0].mxu0
        %v1475 = vadd.f32 %v669, %v1474
        %v1476 = vpop.f32.mrb[0].mxu0
        %v1477 = vadd.f32 %v669, %v1476
        %v1478 = vpop.f32.mrb[0].mxu0
        %v1479 = vpop.f32.mrb[0].mxu0
        %1480 = vdwg.mxu0
        %1481 = vmatprep.subr.bf16.mxu0 %v1020
        %1482 = vmatpush1.bf16.msra.mxu0 %v1019
        %1483 = vmatprep.subr.bf16.mxu0 %v1036
        %1484 = vmatpush1.bf16.msra.mxu0 %v1035
        %1485 = vmatprep.subr.bf16.mxu0 %v1052
        %1486 = vmatpush1.bf16.msra.mxu0 %v1051
        %1487 = vmatprep.subr.bf16.mxu0 %v1068
        %1488 = vmatpush1.bf16.msra.mxu0 %v1067
        %1489 = vmatprep.subr.bf16.mxu0 %v1084
        %1490 = vmatpush1.bf16.msra.mxu0 %v1083
        %1491 = vmatprep.subr.bf16.mxu0 %v1100
        %1492 = vmatpush1.bf16.msra.mxu0 %v1099
        %1493 = vmatprep.subr.bf16.mxu0 %v1116
        %1494 = vmatpush1.bf16.msra.mxu0 %v1115
        %1495 = vmatprep.subr.bf16.mxu0 0
        %1496 = vmatpush1.bf16.msra.mxu0 0
        %1497 = vmatprep.subr.bf16.mxu0 0
        %1498 = vmatpush1.bf16.msra.mxu0 0
        %1499 = vmatprep.subr.bf16.mxu0 0
        %1500 = vmatpush1.bf16.msra.mxu0 0
        %1501 = vmatprep.subr.bf16.mxu0 0
        %1502 = vmatpush1.bf16.msra.mxu0 0
        %1503 = vmatprep.subr.bf16.mxu0 0
        %1504 = vmatpush1.bf16.msra.mxu0 0
        %1505 = vmatprep.subr.bf16.mxu0 0
        %1506 = vmatpush1.bf16.msra.mxu0 0
        %1507 = vmatprep.subr.bf16.mxu0 0
        %1508 = vmatpush1.bf16.msra.mxu0 0
        %1509 = vmatprep.subr.bf16.mxu0 0
        %1510 = vmatpush1.bf16.msra.mxu0 0
        %1511 = vmatprep.subr.bf16.mxu0 0
        %1512 = vmatpush1.bf16.msra.mxu0 0
        %1513 = vmatprep.mubr.bf16.mxu0 0
        %1514 = vmatmul.mubr.bf16.gmra.mrb[0].mxu0 %v1233
        %v1515 = vpop.f32.mrb[0].mxu0
        %v1516 = vadd.f32 %v669, %v1515
        %v1517 = vpop.f32.mrb[0].mxu0
        %v1518 = vadd.f32 %v669, %v1517
        %v1519 = vpop.f32.mrb[0].mxu0
        %v1520 = vpop.f32.mrb[0].mxu0
        %1521 = vdwg.mxu0
        %1522 = vmatprep.subr.bf16.mxu0 %v1022
        %1523 = vmatpush1.bf16.msra.mxu0 %v1021
        %1524 = vmatprep.subr.bf16.mxu0 %v1038
        %1525 = vmatpush1.bf16.msra.mxu0 %v1037
        %1526 = vmatprep.subr.bf16.mxu0 %v1054
        %1527 = vmatpush1.bf16.msra.mxu0 %v1053
        %1528 = vmatprep.subr.bf16.mxu0 %v1070
        %1529 = vmatpush1.bf16.msra.mxu0 %v1069
        %1530 = vmatprep.subr.bf16.mxu0 %v1086
        %1531 = vmatpush1.bf16.msra.mxu0 %v1085
        %1532 = vmatprep.subr.bf16.mxu0 %v1102
        %1533 = vmatpush1.bf16.msra.mxu0 %v1101
        %1534 = vmatprep.subr.bf16.mxu0 %v1118
        %1535 = vmatpush1.bf16.msra.mxu0 %v1117
        %1536 = vmatprep.subr.bf16.mxu0 0
        %1537 = vmatpush1.bf16.msra.mxu0 0
        %1538 = vmatprep.subr.bf16.mxu0 0
        %1539 = vmatpush1.bf16.msra.mxu0 0
        %1540 = vmatprep.subr.bf16.mxu0 0
        %1541 = vmatpush1.bf16.msra.mxu0 0
        %1542 = vmatprep.subr.bf16.mxu0 0
        %1543 = vmatpush1.bf16.msra.mxu0 0
        %1544 = vmatprep.subr.bf16.mxu0 0
        %1545 = vmatpush1.bf16.msra.mxu0 0
        %1546 = vmatprep.subr.bf16.mxu0 0
        %1547 = vmatpush1.bf16.msra.mxu0 0
        %1548 = vmatprep.subr.bf16.mxu0 0
        %1549 = vmatpush1.bf16.msra.mxu0 0
        %1550 = vmatprep.subr.bf16.mxu0 0
        %1551 = vmatpush1.bf16.msra.mxu0 0
        %1552 = vmatprep.subr.bf16.mxu0 0
        %1553 = vmatpush1.bf16.msra.mxu0 0
        %1554 = vmatprep.mubr.bf16.mxu0 0
        %1555 = vmatmul.mubr.bf16.gmra.mrb[0].mxu0 %v1233
        %v1556 = vpop.f32.mrb[0].mxu0
        %v1557 = vadd.f32 %v669, %v1556
        %v1558 = vpop.f32.mrb[0].mxu0
        %v1559 = vadd.f32 %v669, %v1558
        %v1560 = vpop.f32.mrb[0].mxu0
        %v1561 = vpop.f32.mrb[0].mxu0
        %1562 = vdwg.mxu0
        %s1563 = sld [smem:[#allocation4]]
        %vm1564 = vcmp.gt.f32.partialorder %v1270, 0.0
        %vm1565 = vcmp.gt.f32.partialorder %v1272, 0.0
        %vm1566 = vcmp.gt.f32.partialorder %v1311, 0.0
        %vm1567 = vcmp.gt.f32.partialorder %v1313, 0.0
        %vm1568 = vcmp.gt.f32.partialorder %v1352, 0.0
        %vm1569 = vcmp.gt.f32.partialorder %v1354, 0.0
        %vm1570 = vcmp.gt.f32.partialorder %v1393, 0.0
        %vm1571 = vcmp.gt.f32.partialorder %v1395, 0.0
        %vm1572 = vcmp.gt.f32.partialorder %v1434, 0.0
        %vm1573 = vcmp.gt.f32.partialorder %v1436, 0.0
        %vm1574 = vcmp.gt.f32.partialorder %v1475, 0.0
        %vm1575 = vcmp.gt.f32.partialorder %v1477, 0.0
        %vm1576 = vcmp.gt.f32.partialorder %v1516, 0.0
        %vm1577 = vcmp.gt.f32.partialorder %v1518, 0.0
        %vm1578 = vcmp.gt.f32.partialorder %v1557, 0.0
        %vm1579 = vcmp.gt.f32.partialorder %v1559, 0.0
        %v1580 = vstv %s1563
        %v1581 = vmul.f32 %v1580, %v1270
        %v1582 = vmul.f32 %v1580, %v1272
        %v1583 = vmul.f32 %v1580, %v1311
        %v1584 = vmul.f32 %v1580, %v1313
        %v1585 = vmul.f32 %v1580, %v1352
        %v1586 = vmul.f32 %v1580, %v1354
        %v1587 = vmul.f32 %v1580, %v1393
        %v1588 = vmul.f32 %v1580, %v1395
        %v1589 = vmul.f32 %v1580, %v1434
        %v1590 = vmul.f32 %v1580, %v1436
        %v1591 = vmul.f32 %v1580, %v1475
        %v1592 = vmul.f32 %v1580, %v1477
        %v1593 = vmul.f32 %v1580, %v1516
        %v1594 = vmul.f32 %v1580, %v1518
        %v1595 = vmul.f32 %v1580, %v1557
        %v1596 = vmul.f32 %v1580, %v1559
        %v1597 = vsel %vm1564, %v1270, %v1581
        %v1598 = vsel %vm1565, %v1272, %v1582
        %v1599 = vsel %vm1566, %v1311, %v1583
        %v1600 = vsel %vm1567, %v1313, %v1584
        %v1601 = vsel %vm1568, %v1352, %v1585
        %v1602 = vsel %vm1569, %v1354, %v1586
        %v1603 = vsel %vm1570, %v1393, %v1587
        %v1604 = vsel %vm1571, %v1395, %v1588
        %v1605 = vsel %vm1572, %v1434, %v1589
        %v1606 = vsel %vm1573, %v1436, %v1590
        %v1607 = vsel %vm1574, %v1475, %v1591
        %v1608 = vsel %vm1575, %v1477, %v1592
        %v1609 = vsel %vm1576, %v1516, %v1593
        %v1610 = vsel %vm1577, %v1518, %v1594
        %v1611 = vsel %vm1578, %v1557, %v1595
        %v1612 = vsel %vm1579, %v1559, %v1596
        %1613 = vst [vmem:[%s534] sm:$0xff] %v1597
        %1614 = vst [vmem:[%s534 + $0x8] sm:$0xff] %v1598
        %1615 = vst [vmem:[%s534 + $0x10] sm:$0xff] %v1599
        %1616 = vst [vmem:[%s534 + $0x18] sm:$0xff] %v1600
        %1617 = vst [vmem:[%s534 + $0x20] sm:$0xff] %v1601
        %1618 = vst [vmem:[%s534 + $0x28] sm:$0xff] %v1602
        %1619 = vst [vmem:[%s534 + $0x30] sm:$0xff] %v1603
        %1620 = vst [vmem:[%s534 + $0x38] sm:$0xff] %v1604
        %1621 = vst [vmem:[%s534 + $0x40] sm:$0xff] %v1605
        %1622 = vst [vmem:[%s534 + $0x48] sm:$0xff] %v1606
        %1623 = vst [vmem:[%s534 + $0x50] sm:$0xff] %v1607
        %1624 = vst [vmem:[%s534 + $0x58] sm:$0xff] %v1608
        %1625 = vst [vmem:[%s534 + $0x60] sm:$0xff] %v1609
        %1626 = vst [vmem:[%s534 + $0x68] sm:$0xff] %v1610
        %1627 = vst [vmem:[%s534 + $0x70] sm:$0xff] %v1611
        %1628 = vst [vmem:[%s534 + $0x78] sm:$0xff] %v1612
        %s1629 = smul.u32 %s24, 2048
        %v1630 = vlaneseq
        %v1631 = vand.u32 %v1630, 127
        %v1632 = vadd.s32 %v1631, 128
        %v1633 = vadd.s32 %v1631, 256
        %v1634 = vadd.s32 %v1631, 384
        %v1635 = vadd.s32 %v1631, 512
        %v1636 = vadd.s32 %v1631, 640
        %v1637 = vadd.s32 %v1631, 768
        %v1638 = vadd.s32 %v1631, 896
        %v1639 = vadd.s32 %v1631, 1024
        %v1640 = vadd.s32 %v1631, 1152
        %v1641 = vadd.s32 %v1631, 1280
        %v1642 = vadd.s32 %v1631, 1408
        %v1643 = vadd.s32 %v1631, 1536
        %v1644 = vadd.s32 %v1631, 1664
        %v1645 = vadd.s32 %v1631, 1792
        %v1646 = vadd.s32 %v1631, 1920
        %v1647 = vstv %s1629
        %v1648 = vadd.s32 %v1647, %v1631
        %v1649 = vadd.s32 %v1647, %v1632
        %v1650 = vadd.s32 %v1647, %v1633
        %v1651 = vadd.s32 %v1647, %v1634
        %v1652 = vadd.s32 %v1647, %v1635
        %v1653 = vadd.s32 %v1647, %v1636
        %v1654 = vadd.s32 %v1647, %v1637
        %v1655 = vadd.s32 %v1647, %v1638
        %v1656 = vadd.s32 %v1647, %v1639
        %v1657 = vadd.s32 %v1647, %v1640
        %v1658 = vadd.s32 %v1647, %v1641
        %v1659 = vadd.s32 %v1647, %v1642
        %v1660 = vadd.s32 %v1647, %v1643
        %v1661 = vadd.s32 %v1647, %v1644
        %v1662 = vadd.s32 %v1647, %v1645
        %v1663 = vadd.s32 %v1647, %v1646
        %vm1664 = vcmp.lt.s32.totalorder %v1648, 3072
        %vm1665 = vcmp.lt.s32.totalorder %v1649, 3072
        %vm1666 = vcmp.lt.s32.totalorder %v1650, 3072
        %vm1667 = vcmp.lt.s32.totalorder %v1651, 3072
        %vm1668 = vcmp.lt.s32.totalorder %v1652, 3072
        %vm1669 = vcmp.lt.s32.totalorder %v1653, 3072
        %vm1670 = vcmp.lt.s32.totalorder %v1654, 3072
        %vm1671 = vcmp.lt.s32.totalorder %v1655, 3072
        %vm1672 = vcmp.lt.s32.totalorder %v1656, 3072
        %vm1673 = vcmp.lt.s32.totalorder %v1657, 3072
        %vm1674 = vcmp.lt.s32.totalorder %v1658, 3072
        %vm1675 = vcmp.lt.s32.totalorder %v1659, 3072
        %vm1676 = vcmp.lt.s32.totalorder %v1660, 3072
        %vm1677 = vcmp.lt.s32.totalorder %v1661, 3072
        %vm1678 = vcmp.lt.s32.totalorder %v1662, 3072
        %vm1679 = vcmp.lt.s32.totalorder %v1663, 3072
        %v1680 = vsel %vm1664, %v1597, 0.0
        %v1681 = vsel %vm1665, %v1598, 0.0
        %v1682 = vsel %vm1666, %v1599, 0.0
        %v1683 = vsel %vm1667, %v1600, 0.0
        %v1684 = vsel %vm1668, %v1601, 0.0
        %v1685 = vsel %vm1669, %v1602, 0.0
        %v1686 = vsel %vm1670, %v1603, 0.0
        %v1687 = vsel %vm1671, %v1604, 0.0
        %v1688 = vsel %vm1672, %v1605, 0.0
        %v1689 = vsel %vm1673, %v1606, 0.0
        %v1690 = vsel %vm1674, %v1607, 0.0
        %v1691 = vsel %vm1675, %v1608, 0.0
        %v1692 = vsel %vm1676, %v1609, 0.0
        %v1693 = vsel %vm1677, %v1610, 0.0
        %v1694 = vsel %vm1678, %v1611, 0.0
        %v1695 = vsel %vm1679, %v1612, 0.0
        %v1696 = vld [vmem:[#allocation2] sm:$0xff]
        %v1697 = vadd.f32 %v1680, %v1681
        %v1698 = vadd.f32 %v1697, %v1682
        %v1699 = vadd.f32 %v1698, %v1683
        %v1700 = vadd.f32 %v1699, %v1684
        %v1701 = vadd.f32 %v1700, %v1685
        %v1702 = vadd.f32 %v1701, %v1686
        %v1703 = vadd.f32 %v1702, %v1687
        %v1704 = vadd.f32 %v1703, %v1688
        %v1705 = vadd.f32 %v1704, %v1689
        %v1706 = vadd.f32 %v1705, %v1690
        %v1707 = vadd.f32 %v1706, %v1691
        %v1708 = vadd.f32 %v1707, %v1692
        %v1709 = vadd.f32 %v1708, %v1693
        %v1710 = vadd.f32 %v1709, %v1694
        %v1711 = vadd.f32 %v1710, %v1695
        %1712 = vadd.xlane.f32.xlu0 %v1711
        %v1713 = vpop.xlane.xlu0 %1712
        %v1714 = vadd.f32 %v1696, %v1713
        %vm1715 = vcmask 7168
        %1716 = vst.msk [vmem:[#allocation2] sm:$0xff] %vm1715, %v1714
        %v1717 = vld [vmem:[#allocation3] sm:$0xff]
        %v1718 = vmul.f32 %v1680, %v1680
        %v1719 = vmul.f32 %v1681, %v1681
        %v1720 = vmul.f32 %v1682, %v1682
        %v1721 = vmul.f32 %v1683, %v1683
        %v1722 = vmul.f32 %v1684, %v1684
        %v1723 = vmul.f32 %v1685, %v1685
        %v1724 = vmul.f32 %v1686, %v1686
        %v1725 = vmul.f32 %v1687, %v1687
        %v1726 = vmul.f32 %v1688, %v1688
        %v1727 = vmul.f32 %v1689, %v1689
        %v1728 = vmul.f32 %v1690, %v1690
        %v1729 = vmul.f32 %v1691, %v1691
        %v1730 = vmul.f32 %v1692, %v1692
        %v1731 = vmul.f32 %v1693, %v1693
        %v1732 = vmul.f32 %v1694, %v1694
        %v1733 = vmul.f32 %v1695, %v1695
        %v1734 = vadd.f32 %v1718, %v1719
        %v1735 = vadd.f32 %v1734, %v1720
        %v1736 = vadd.f32 %v1735, %v1721
        %v1737 = vadd.f32 %v1736, %v1722
        %v1738 = vadd.f32 %v1737, %v1723
        %v1739 = vadd.f32 %v1738, %v1724
        %v1740 = vadd.f32 %v1739, %v1725
        %v1741 = vadd.f32 %v1740, %v1726
        %v1742 = vadd.f32 %v1741, %v1727
        %v1743 = vadd.f32 %v1742, %v1728
        %v1744 = vadd.f32 %v1743, %v1729
        %v1745 = vadd.f32 %v1744, %v1730
        %v1746 = vadd.f32 %v1745, %v1731
        %v1747 = vadd.f32 %v1746, %v1732
        %v1748 = vadd.f32 %v1747, %v1733
        %1749 = vadd.xlane.f32.xlu0 %v1748
        %v1750 = vpop.xlane.xlu0 %1749
        %v1751 = vadd.f32 %v1717, %v1750
        %1752 = vst.msk [vmem:[#allocation3] sm:$0xff] %vm1715, %v1751
        %p1753 = scmp.eq.s32.totalorder %s24, 1
        // Predicated region
        $region64: #{conv3d_adn_forward.2} parent=54 // pred_check
          %p1754 = pneg %p1753
        $region65: #{conv3d_adn_forward.2} parent=54 // pred_check_branch
          %1756 = sbr.rel (%p1754) target = $region67
        $region66: #{conv3d_adn_forward.2} parent=54 // pred_region
          %v1757 = vld [vmem:[#allocation2] sm:$0xff]
          %v1758 = vmul.f32 %v1757, 0.00032552084
          %v1759 = vld [vmem:[#allocation3] sm:$0xff]
          %v1760 = vmul.f32 %v1759, 0.00032552084
          %v1761 = vmul.f32 %v1758, %v1758
          %v1762 = vsub.f32 %v1760, %v1761
          %1763 = vst.msk [vmem:[%s539] sm:$0xff] %vm1715, %v1758
          %v1764 = vmax.f32 %v1762, 0.0
          %v1765 = vadd.f32 %v1764, 1e-05
          %v1766 = vrsqrt.pop %v1765
          %1767 = vst.msk [vmem:[%s543] sm:$0xff] %vm1715, %v1766
        $region67: #{conv3d_adn_forward.2} parent=54 // pred_fallthru
          _
        %s1768 = smul.u32 16, %s24
        %p1769 = scmp.lt.s32.totalorder %s23, 1
        %s1770 = scalar_select %p1769, %s23, 1
        %p1771 = scmp.lt.s32.totalorder %s1768, 31
        %s1772 = scalar_select %p1771, %s1768, 31
        %s1773 = smul.addr %s1770, 32
        %s1774 = sadd.s32 %s1772, %s1773
        %s1775 = smul.addr %s1774, 8
        %s1776 = scalar_lea.vmem %s4, %s1775
        %p1777 = scmp.lt.s32.totalorder %s23, 1
        %s1778 = scalar_select %p1777, %s23, 1
        %s1779 = smul.addr %s1778, 8
        %s1780 = scalar_lea.vmem %s5, %s1779
        %p1781 = scmp.lt.s32.totalorder %s23, 1
        %s1782 = scalar_select %p1781, %s23, 1
        %s1783 = smul.addr %s1782, 8
        %s1784 = scalar_lea.vmem %s6, %s1783
        // Predicated region
        $region68: #{conv3d_adn_forward.2} parent=54 // pred_check
          %p1785 = pneg %p142
        $region69: #{conv3d_adn_forward.2} parent=54 // pred_check_branch
          %1787 = sbr.rel (%p1785) target = $region71
        $region70: #{conv3d_adn_forward.2} parent=54 // pred_region
          %s1788 = smul.u32 16, %s24
        $region71: #{conv3d_adn_forward.2} parent=54 // pred_fallthru
          _
        // Predicated region
        $region72: #{conv3d_adn_forward.2} parent=54 // pred_check
          %p1789 = pneg %p168
        $region73: #{conv3d_adn_forward.2} parent=54 // pred_check_branch
          %1791 = sbr.rel (%p1789) target = $region75
        $region74: #{conv3d_adn_forward.2} parent=54 // pred_region
          _
        $region75: #{conv3d_adn_forward.2} parent=54 // pred_fallthru
          _
        // Predicated region
        $region76: #{conv3d_adn_forward.2} parent=54 // pred_check
          %p1792 = pneg %p194
        $region77: #{conv3d_adn_forward.2} parent=54 // pred_check_branch
          %1794 = sbr.rel (%p1792) target = $region79
        $region78: #{conv3d_adn_forward.2} parent=54 // pred_region
          _
        $region79: #{conv3d_adn_forward.2} parent=54 // pred_fallthru
          _
      $region55: #{conv3d_adn_forward.2} parent=5 // pred_fallthru
        _
      %p1795 = scmp.le.s32.totalorder 2, %s14
      // Predicated region
      $region80: #{conv3d_adn_forward.2} parent=5 // pred_check
        %p1796 = pneg %p1795
      $region81: #{conv3d_adn_forward.2} parent=5 // pred_check_branch
        %1798 = sbr.rel (%p1796) target = $region83
      $region82: #{conv3d_adn_forward.2} parent=5 // pred_region
        %s1799 = ssub.s32 %s14, 2
        // Predicated region
        $region84: #{conv3d_adn_forward.2} parent=82 // pred_check
          %p1800 = pneg %p148
        $region85: #{conv3d_adn_forward.2} parent=82 // pred_check_branch
          %1802 = sbr.rel (%p1800) target = $region87
        $region86: #{conv3d_adn_forward.2} parent=82 // pred_region
          %s1803 = smul.u32 16, %s26
          %p1804 = scmp.lt.s32.totalorder %s25, 1
          %s1805 = scalar_select %p1804, %s25, 1
          %p1806 = scmp.lt.s32.totalorder %s1803, 31
          %s1807 = scalar_select %p1806, %s1803, 31
          %s1808 = smul.addr %s1805, 32
          %s1809 = sadd.s32 %s1807, %s1808
          %s1810 = smul.addr %s1809, 8
          %s1811 = scalar_lea.vmem %s4, %s1810
        $region87: #{conv3d_adn_forward.2} parent=82 // pred_fallthru
          _
        // Predicated region
        $region88: #{conv3d_adn_forward.2} parent=82 // pred_check
          %p1812 = pneg %p174
        $region89: #{conv3d_adn_forward.2} parent=82 // pred_check_branch
          %1814 = sbr.rel (%p1812) target = $region91
        $region90: #{conv3d_adn_forward.2} parent=82 // pred_region
          %p1815 = scmp.lt.s32.totalorder %s25, 1
          %s1816 = scalar_select %p1815, %s25, 1
          %s1817 = smul.addr %s1816, 8
          %s1818 = scalar_lea.vmem %s5, %s1817
        $region91: #{conv3d_adn_forward.2} parent=82 // pred_fallthru
          _
        // Predicated region
        $region92: #{conv3d_adn_forward.2} parent=82 // pred_check
          %p1819 = pneg %p200
        $region93: #{conv3d_adn_forward.2} parent=82 // pred_check_branch
          %1821 = sbr.rel (%p1819) target = $region95
        $region94: #{conv3d_adn_forward.2} parent=82 // pred_region
          %p1822 = scmp.lt.s32.totalorder %s25, 1
          %s1823 = scalar_select %p1822, %s25, 1
          %s1824 = smul.addr %s1823, 8
          %s1825 = scalar_lea.vmem %s6, %s1824
        $region95: #{conv3d_adn_forward.2} parent=82 // pred_fallthru
          _
      $region83: #{conv3d_adn_forward.2} parent=5 // pred_fallthru
        _
    $region6: #{conv3d_adn_forward.2} parent=1 // loop_footer
      %s18 = sadd.s32 1, %s14
    $region7: #{conv3d_adn_forward.2} parent=1 // loop_footer_branch
      %13 = sbr.rel target = $region3
    $region8: #{conv3d_adn_forward.2} parent=1 // loop_exit
      _

</llo_original>
